<compile_context>
chip_gen: v7x
topology: tpu7x:2x2x1
jax: 0.10.0
libtpu: 0.0.40
codegen_flags: <defaults>
</compile_context>

<pallas_src>
import jax
import jax.numpy as jnp
from jax import lax
from jax.experimental import pallas as pl
from jax.experimental.pallas import tpu as pltpu

COMPUTE_DTYPE = jnp.bfloat16   # MXU operand dtype; use jnp.float32 for exact f32.
MAX_BLOCK_BATCH = 32           # upper bound on images processed per grid step


# ---------------------------------------------------------------------------
# The fused kernel: one block of NB images per grid step
# ---------------------------------------------------------------------------
def _lenet5_kernel(x_ref, b1_ref, c1b_ref, sle1_ref, slo1_ref,
                   b2p_ref, c2b_ref, sle2_ref, slo2_ref,
                   w1_ref, fb1_ref, w2_ref, fb2_ref, w3_ref, fb3_ref,
                   out_ref, t2_scr):
    f32 = jnp.float32
    cd = b1_ref.dtype                       # MXU compute dtype (bf16 or f32)
    nb = x_ref.shape[0]                     # images in this block (compile-time)

    def per_image(n, carry):
        x_im = x_ref[n]                     # (28, 160) cd  -- im2row slab of image n

        # conv1 + bias + ReLU: single K=160 matmul -> (28, 6*28)
        y1 = jnp.maximum(
            jnp.dot(x_im, b1_ref[...], preferred_element_type=f32) + c1b_ref[...],
            0.0)                                                      # (28, 168) f32

        # pool1: lane-pair max, then even/odd row gather via one-hot matmuls.
        m1 = jnp.maximum(y1[:, 0:167], y1[:, 1:168]).astype(cd)      # (28, 167), 1 cast
        t1 = jnp.maximum(
            jnp.dot(sle1_ref[...], m1, preferred_element_type=f32),
            jnp.dot(slo1_ref[...], m1, preferred_element_type=f32))  # (14, 167) f32

        # conv2 + bias + ReLU (SR1 folded into B2p): 5 band matmuls with K=167.
        t1c = t1.astype(cd)
        c2 = jnp.dot(t1c[0:10, :], b2p_ref[0], preferred_element_type=f32)
        for ki in range(1, 5):
            c2 = c2 + jnp.dot(t1c[ki:ki + 10, :], b2p_ref[ki],
                              preferred_element_type=f32)
        y2 = jnp.maximum(c2 + c2b_ref[...], 0.0)                     # (10, 160) f32

        # pool2: same pattern -> (5, 159)
        m2 = jnp.maximum(y2[:, 0:159], y2[:, 1:160]).astype(cd)      # (10, 159)
        t2 = jnp.maximum(
            jnp.dot(sle2_ref[...], m2, preferred_element_type=f32),
            jnp.dot(slo2_ref[...], m2, preferred_element_type=f32))  # (5, 159) f32

        # Stash this image's pooled rows for the block-batched FC stage.
        for p in range(5):
            t2_scr[p, pl.ds(n, 1), :] = t2[p:p + 1, :]
        return carry

    lax.fori_loop(0, nb, per_image, 0)

    # Batched FC stack over the whole block (M = NB, not 1):
    # fc1 (SR2 + torch.flatten permutation folded into W1pp): 5 K=159 matmuls.
    h = jnp.dot(t2_scr[0].astype(cd), w1_ref[0], preferred_element_type=f32)
    for p in range(1, 5):
        h = h + jnp.dot(t2_scr[p].astype(cd), w1_ref[p], preferred_element_type=f32)
    h1 = jnp.maximum(h + fb1_ref[...], 0.0)                          # (NB, 120) f32
    h2 = jnp.maximum(jnp.dot(h1.astype(cd), w2_ref[...],
                             preferred_element_type=f32) + fb2_ref[...], 0.0)
    logits = jnp.dot(h2.astype(cd), w3_ref[...],
                     preferred_element_type=f32) + fb3_ref[...]      # (NB, 128) f32
    out_ref[0] = logits


# ---------------------------------------------------------------------------
# One-time (hoisted) weight reformatting
# ---------------------------------------------------------------------------
def _conv_band(w, in_w, out_w):
    """Pack (OutC, InC, KH, KW) conv weights into per-row band matrices:
       band[ki, ic*in_w + c, oc*out_w + q] = w[oc, ic, ki, c-q]  (0 <= c-q < KW),
       so that conv = sum_ki  act_wide[ki:ki+OH, :] @ band[ki]."""
    outc, inc, kh, kw = w.shape
    kj = jnp.arange(in_w)[:, None] - jnp.arange(out_w)[None, :]
    valid = ((kj >= 0) & (kj < kw)).astype(w.dtype)
    band = w[:, :, :, jnp.clip(kj, 0, kw - 1)] * valid[None, None, None]
    return band.transpose(2, 1, 3, 0, 4).reshape(kh, inc * in_w, outc * out_w)


def _row_select(h):
    """One-hot (h/2, h) matrices picking even / odd rows (the stride-2 row part of
    2x2 max pooling:  pooled = max(SLe @ m, SLo @ m), exact since rows are one-hot)."""
    r = jnp.arange(h // 2)[:, None]
    c = jnp.arange(h)[None, :]
    return (c == 2 * r).astype(jnp.float32), (c == 2 * r + 1).astype(jnp.float32)


def _col_select(w, nchan):
    """One-hot (nchan*w-1, nchan*w/2) matrix picking column ch*w + 2q of the
    lane-pair-max map (discards the cross-channel columns)."""
    pw = w // 2
    col = jnp.arange(nchan * pw)
    tgt = (col // pw) * w + 2 * (col % pw)
    return (jnp.arange(nchan * w - 1)[:, None] == tgt[None, :]).astype(jnp.float32)


def prepare_params(params, compute_dtype=COMPUTE_DTYPE):
    """Convert canonical PyTorch-layout weights into the fused-kernel layout (once)."""
    cd, f32 = compute_dtype, jnp.float32

    # conv1 bands flattened to one (160, 168) matrix (im2row happens on the input).
    b1f = _conv_band(params["conv1_w"], 32, 28).reshape(160, 168)

    sle1, slo1 = _row_select(28)               # (14, 28) each
    sle2, slo2 = _row_select(10)               # (5, 10) each
    sr1 = _col_select(28, 6)                   # (167, 84)
    sr2 = _col_select(10, 16)                  # (159, 80)

    # conv2 bands with pool1 column selection folded in (exact row scatter of B2).
    b2 = _conv_band(params["conv2_w"], 14, 10)                      # (5, 84, 160)
    b2p = jnp.einsum("ca,kab->kcb", sr1, b2)                        # (5, 167, 160)

    # fc1 with torch.flatten permutation and pool2 column selection folded in.
    w1p = (params["fc1_w"].T.reshape(16, 5, 5, 120)
           .transpose(1, 0, 2, 3).reshape(5, 80, 120))
    w1pp = jnp.einsum("ca,pab->pcb", sr2, w1p)                      # (5, 159, 120)

    # fc3 zero-padded to 128 output lanes for a lane-dense final store.
    w3 = jnp.zeros((84, 128), f32).at[:, :10].set(params["fc3_w"].T)
    fb3 = jnp.zeros((1, 128), f32).at[0, :10].set(params["fc3_b"])

    return {
        "B1": b1f.astype(cd),                                        # (160, 168)
        "c1b": jnp.repeat(params["conv1_b"], 28)[None, :].astype(f32),
        "SLe1": sle1.astype(cd), "SLo1": slo1.astype(cd),
        "B2p": b2p.astype(cd),                                       # (5, 167, 160)
        "c2b": jnp.repeat(params["conv2_b"], 10)[None, :].astype(f32),
        "SLe2": sle2.astype(cd), "SLo2": slo2.astype(cd),
        "W1pp": w1pp.astype(cd),                                     # (5, 159, 120)
        "fb1": params["fc1_b"][None, :].astype(f32),
        "W2": params["fc2_w"].T.astype(cd),                          # (120, 84)
        "fb2": params["fc2_b"][None, :].astype(f32),
        "W3": w3.astype(cd),                                         # (84, 128)
        "fb3": fb3,                                                  # (1, 128)
    }


# ---------------------------------------------------------------------------
# Forward pass (one pallas_call)
# ---------------------------------------------------------------------------
_WEIGHT_ORDER = ("B1", "c1b", "SLe1", "SLo1", "B2p", "c2b", "SLe2", "SLo2",
                 "W1pp", "fb1", "W2", "fb2", "W3", "fb3")


def _const_spec(shape):
    return pl.BlockSpec(shape, lambda b, _r=len(shape): (0,) * _r)


def _pick_block_batch(batch):
    # Keep >=2 grid steps whenever batch >= 2 (v7x megacore), cap the block size.
    return max(1, min(MAX_BLOCK_BATCH, pl.cdiv(batch, 2)))


def lenet5_forward(kparams, x, *, block_batch=None):
    """x: (B, 1, 28, 28) float32 NCHW (PyTorch convention) -> (B, 10) float32."""
    B = x.shape[0]
    nb = block_batch or _pick_block_batch(B)
    g = pl.cdiv(B, nb)
    b_pad = g * nb
    cd = kparams["B1"].dtype

    # Per-call glue (pure layout): pad batch to a multiple of nb, spatial pad for
    # conv1 (padding=2), build the im2row slab so conv1 is one K=160 matmul per
    # image, and cast to the MXU dtype exactly once.
    x_p = jnp.pad(x[:, 0], ((0, b_pad - B), (2, 2), (2, 2)))          # (b_pad, 32, 32)
    slab = jnp.concatenate([x_p[:, k:k + 28, :] for k in range(5)],
                           axis=-1).astype(cd)                        # (b_pad, 28, 160)
    weights = [kparams[k] for k in _WEIGHT_ORDER]

    out = pl.pallas_call(
        _lenet5_kernel,
        grid=(g,),
        in_specs=[pl.BlockSpec((nb, 28, 160), lambda b: (b, 0, 0))]
                 + [_const_spec(w.shape) for w in weights],
        out_specs=pl.BlockSpec((1, nb, 128), lambda b: (b, 0, 0)),
        out_shape=jax.ShapeDtypeStruct((g, nb, 128), jnp.float32),
        scratch_shapes=[pltpu.VMEM((5, nb, 159), jnp.float32)],
        compiler_params=pltpu.CompilerParams(
            dimension_semantics=("parallel",)),   # blocks split across TCs on v7x
    )(slab, *weights)
    return out.reshape(b_pad, 128)[:B, :10]


# ---------------------------------------------------------------------------
# Canonical params + pure-JAX reference (for validation)
# ---------------------------------------------------------------------------
def init_params(key):
    """Canonical PyTorch-layout LeNet-5 parameters (uniform(-1/sqrt(fan_in), ...))."""
    def uniform(k, shape, fan_in):
        bound = 1.0 / jnp.sqrt(jnp.float32(fan_in))
        return jax.random.uniform(k, shape, jnp.float32, -bound, bound)

    ks = jax.random.split(key, 10)
    return {
        "conv1_w": uniform(ks[0], (6, 1, 5, 5), 25),
        "conv1_b": uniform(ks[1], (6,), 25),
        "conv2_w": uniform(ks[2], (16, 6, 5, 5), 150),
        "conv2_b": uniform(ks[3], (16,), 150),
        "fc1_w": uniform(ks[4], (120, 400), 400),
        "fc1_b": uniform(ks[5], (120,), 400),
        "fc2_w": uniform(ks[6], (84, 120), 120),
        "fc2_b": uniform(ks[7], (84,), 120),
        "fc3_w": uniform(ks[8], (10, 84), 84),
        "fc3_b": uniform(ks[9], (10,), 84),
    }


def lenet5_reference(params, x):
    """Pure-JAX (XLA) f32 reference matching the PyTorch module."""
    dn = ("NCHW", "OIHW", "NCHW")

    def pool(y):
        return jnp.maximum(jnp.maximum(y[:, :, 0::2, 0::2], y[:, :, 0::2, 1::2]),
                           jnp.maximum(y[:, :, 1::2, 0::2], y[:, :, 1::2, 1::2]))

    y = lax.conv_general_dilated(x, params["conv1_w"], (1, 1),
                                 ((2, 2), (2, 2)), dimension_numbers=dn)
    y = pool(jnp.maximum(y + params["conv1_b"][None, :, None, None], 0.0))
    y = lax.conv_general_dilated(y, params["conv2_w"], (1, 1),
                                 "VALID", dimension_numbers=dn)
    y = pool(jnp.maximum(y + params["conv2_b"][None, :, None, None], 0.0))
    y = y.reshape(y.shape[0], -1)
    y = jnp.maximum(y @ params["fc1_w"].T + params["fc1_b"], 0.0)
    y = jnp.maximum(y @ params["fc2_w"].T + params["fc2_b"], 0.0)
    return y @ params["fc3_w"].T + params["fc3_b"]


if __name__ == "__main__":
    key = jax.random.PRNGKey(0)
    pkey, xkey = jax.random.split(key)
    params = init_params(pkey)

    # 1) default bf16-MXU path at B=2 (nb=1, grid=(2,))
    x = jax.random.normal(xkey, (2, 1, 28, 28), jnp.float32)
    kparams = prepare_params(params)
    out = jax.block_until_ready(jax.jit(lenet5_forward)(kparams, x))
    assert out.shape == (2, 10) and out.dtype == jnp.float32
    ref = jax.block_until_ready(jax.jit(lenet5_reference)(params, x))
    err = float(jnp.max(jnp.abs(out - ref)))
    assert err < 5e-2, f"bf16 kernel/reference mismatch: max abs err = {err}"

    # 2) f32-MXU path + batch-padding path: B=5 -> nb=3, grid=(2,), one padded image.
    x5 = jax.random.normal(jax.random.fold_in(xkey, 1), (5, 1, 28, 28), jnp.float32)
    kparams_f32 = prepare_params(params, jnp.float32)
    out5 = jax.block_until_ready(jax.jit(lenet5_forward)(kparams_f32, x5))
    ref5 = jax.block_until_ready(jax.jit(lenet5_reference)(params, x5))
    err5 = float(jnp.max(jnp.abs(out5 - ref5)))
    assert err5 < 1e-2, f"f32 kernel/reference mismatch: max abs err = {err5}"

    print("KERNEL_OK")
</pallas_src>

<mosaic_0001>
module attributes {stable_mosaic.version = 11 : i64} {
  func.func @_lenet5_kernel(%arg0: i32, %arg1: memref<1x28x160xbf16, #tpu.memory_space<vmem>>, %arg2: memref<160x168xbf16, #tpu.memory_space<vmem>>, %arg3: memref<1x168xf32, #tpu.memory_space<vmem>>, %arg4: memref<14x28xbf16, #tpu.memory_space<vmem>>, %arg5: memref<14x28xbf16, #tpu.memory_space<vmem>>, %arg6: memref<5x167x160xbf16, #tpu.memory_space<vmem>>, %arg7: memref<1x160xf32, #tpu.memory_space<vmem>>, %arg8: memref<5x10xbf16, #tpu.memory_space<vmem>>, %arg9: memref<5x10xbf16, #tpu.memory_space<vmem>>, %arg10: memref<5x159x120xbf16, #tpu.memory_space<vmem>>, %arg11: memref<1x120xf32, #tpu.memory_space<vmem>>, %arg12: memref<120x84xbf16, #tpu.memory_space<vmem>>, %arg13: memref<1x84xf32, #tpu.memory_space<vmem>>, %arg14: memref<84x128xbf16, #tpu.memory_space<vmem>>, %arg15: memref<1x128xf32, #tpu.memory_space<vmem>>, %arg16: memref<1x1x128xf32, #tpu.memory_space<vmem>>, %arg17: memref<5x1x159xf32, #tpu.memory_space<vmem>>) attributes {dimension_semantics = [#tpu.dimension_semantics<parallel>], iteration_bounds = array<i64: 2>, scalar_prefetch = 0 : i64, scratch_operands = 1 : i64, tpu.core_type = #tpu.core_type<tc>, window_params = [{transform_indices = @transform_0, window_bounds = array<i64: 1, 28, 160>}, {pipeline_mode = #tpu.pipeline_mode<synchronous>, transform_indices = @transform_1, window_bounds = array<i64: 160, 168>}, {pipeline_mode = #tpu.pipeline_mode<synchronous>, transform_indices = @transform_2, window_bounds = array<i64: 1, 168>}, {pipeline_mode = #tpu.pipeline_mode<synchronous>, transform_indices = @transform_3, window_bounds = array<i64: 14, 28>}, {pipeline_mode = #tpu.pipeline_mode<synchronous>, transform_indices = @transform_4, window_bounds = array<i64: 14, 28>}, {pipeline_mode = #tpu.pipeline_mode<synchronous>, transform_indices = @transform_5, window_bounds = array<i64: 5, 167, 160>}, {pipeline_mode = #tpu.pipeline_mode<synchronous>, transform_indices = @transform_6, window_bounds = array<i64: 1, 160>}, {pipeline_mode = #tpu.pipeline_mode<synchronous>, transform_indices = @transform_7, window_bounds = array<i64: 5, 10>}, {pipeline_mode = #tpu.pipeline_mode<synchronous>, transform_indices = @transform_8, window_bounds = array<i64: 5, 10>}, {pipeline_mode = #tpu.pipeline_mode<synchronous>, transform_indices = @transform_9, window_bounds = array<i64: 5, 159, 120>}, {pipeline_mode = #tpu.pipeline_mode<synchronous>, transform_indices = @transform_10, window_bounds = array<i64: 1, 120>}, {pipeline_mode = #tpu.pipeline_mode<synchronous>, transform_indices = @transform_11, window_bounds = array<i64: 120, 84>}, {pipeline_mode = #tpu.pipeline_mode<synchronous>, transform_indices = @transform_12, window_bounds = array<i64: 1, 84>}, {pipeline_mode = #tpu.pipeline_mode<synchronous>, transform_indices = @transform_13, window_bounds = array<i64: 84, 128>}, {pipeline_mode = #tpu.pipeline_mode<synchronous>, transform_indices = @transform_14, window_bounds = array<i64: 1, 128>}, {transform_indices = @transform_15, window_bounds = array<i64: 1, 1, 128>}]} {
    %c0_i32 = arith.constant 0 : i32
    %0 = arith.index_cast %c0_i32 : i32 to index
    %c0 = arith.constant 0 : index
    %c0_0 = arith.constant 0 : index
    %1 = vector.load %arg1[%0, %c0, %c0_0] : memref<1x28x160xbf16, #tpu.memory_space<vmem>>, vector<1x28x160xbf16>
    %2 = vector.shape_cast %1 : vector<1x28x160xbf16> to vector<28x160xbf16>
    %c0_1 = arith.constant 0 : index
    %c0_2 = arith.constant 0 : index
    %3 = vector.load %arg2[%c0_1, %c0_2] : memref<160x168xbf16, #tpu.memory_space<vmem>>, vector<160x168xbf16>
    %cst = arith.constant dense<0.000000e+00> : vector<28x168xf32>
    %4 = tpu.matmul %2, %3, %cst {dimension_numbers = #tpu.dot_dimension_numbers<[1], [0], [0], [1], [0, 0, 1, 1], [], []>} : vector<28x160xbf16>, vector<160x168xbf16>, vector<28x168xf32> -> vector<28x168xf32>
    %c0_3 = arith.constant 0 : index
    %c0_4 = arith.constant 0 : index
    %5 = vector.load %arg3[%c0_3, %c0_4] : memref<1x168xf32, #tpu.memory_space<vmem>>, vector<1x168xf32>
    %6 = vector.broadcast %5 : vector<1x168xf32> to vector<28x168xf32>
    %7 = arith.addf %4, %6 : vector<28x168xf32>
    %cst_5 = arith.constant 0.000000e+00 : f32
    %8 = vector.broadcast %cst_5 : f32 to vector<28x168xf32>
    %9 = arith.maximumf %7, %8 : vector<28x168xf32>
    %10 = vector.extract_strided_slice %9 {offsets = [0, 0], sizes = [28, 167], strides = [1, 1]} : vector<28x168xf32> to vector<28x167xf32>
    %11 = vector.extract_strided_slice %9 {offsets = [0, 1], sizes = [28, 167], strides = [1, 1]} : vector<28x168xf32> to vector<28x167xf32>
    %12 = arith.maximumf %10, %11 : vector<28x167xf32>
    %13 = arith.truncf %12 : vector<28x167xf32> to vector<28x167xbf16>
    %c0_6 = arith.constant 0 : index
    %c0_7 = arith.constant 0 : index
    %14 = vector.load %arg4[%c0_6, %c0_7] : memref<14x28xbf16, #tpu.memory_space<vmem>>, vector<14x28xbf16>
    %cst_8 = arith.constant dense<0.000000e+00> : vector<14x167xf32>
    %15 = tpu.matmul %14, %13, %cst_8 {dimension_numbers = #tpu.dot_dimension_numbers<[1], [0], [0], [1], [0, 0, 1, 1], [], []>} : vector<14x28xbf16>, vector<28x167xbf16>, vector<14x167xf32> -> vector<14x167xf32>
    %c0_9 = arith.constant 0 : index
    %c0_10 = arith.constant 0 : index
    %16 = vector.load %arg5[%c0_9, %c0_10] : memref<14x28xbf16, #tpu.memory_space<vmem>>, vector<14x28xbf16>
    %cst_11 = arith.constant dense<0.000000e+00> : vector<14x167xf32>
    %17 = tpu.matmul %16, %13, %cst_11 {dimension_numbers = #tpu.dot_dimension_numbers<[1], [0], [0], [1], [0, 0, 1, 1], [], []>} : vector<14x28xbf16>, vector<28x167xbf16>, vector<14x167xf32> -> vector<14x167xf32>
    %18 = arith.maximumf %15, %17 : vector<14x167xf32>
    %19 = arith.truncf %18 : vector<14x167xf32> to vector<14x167xbf16>
    %20 = vector.extract_strided_slice %19 {offsets = [0, 0], sizes = [10, 167], strides = [1, 1]} : vector<14x167xbf16> to vector<10x167xbf16>
    %c0_12 = arith.constant 0 : index
    %c0_13 = arith.constant 0 : index
    %c0_14 = arith.constant 0 : index
    %21 = vector.load %arg6[%c0_12, %c0_13, %c0_14] : memref<5x167x160xbf16, #tpu.memory_space<vmem>>, vector<1x167x160xbf16>
    %22 = vector.shape_cast %21 : vector<1x167x160xbf16> to vector<167x160xbf16>
    %cst_15 = arith.constant dense<0.000000e+00> : vector<10x160xf32>
    %23 = tpu.matmul %20, %22, %cst_15 {dimension_numbers = #tpu.dot_dimension_numbers<[1], [0], [0], [1], [0, 0, 1, 1], [], []>} : vector<10x167xbf16>, vector<167x160xbf16>, vector<10x160xf32> -> vector<10x160xf32>
    %24 = vector.extract_strided_slice %19 {offsets = [1, 0], sizes = [10, 167], strides = [1, 1]} : vector<14x167xbf16> to vector<10x167xbf16>
    %c1 = arith.constant 1 : index
    %c0_16 = arith.constant 0 : index
    %c0_17 = arith.constant 0 : index
    %25 = vector.load %arg6[%c1, %c0_16, %c0_17] : memref<5x167x160xbf16, #tpu.memory_space<vmem>>, vector<1x167x160xbf16>
    %26 = vector.shape_cast %25 : vector<1x167x160xbf16> to vector<167x160xbf16>
    %cst_18 = arith.constant dense<0.000000e+00> : vector<10x160xf32>
    %27 = tpu.matmul %24, %26, %cst_18 {dimension_numbers = #tpu.dot_dimension_numbers<[1], [0], [0], [1], [0, 0, 1, 1], [], []>} : vector<10x167xbf16>, vector<167x160xbf16>, vector<10x160xf32> -> vector<10x160xf32>
    %28 = arith.addf %23, %27 : vector<10x160xf32>
    %29 = vector.extract_strided_slice %19 {offsets = [2, 0], sizes = [10, 167], strides = [1, 1]} : vector<14x167xbf16> to vector<10x167xbf16>
    %c2 = arith.constant 2 : index
    %c0_19 = arith.constant 0 : index
    %c0_20 = arith.constant 0 : index
    %30 = vector.load %arg6[%c2, %c0_19, %c0_20] : memref<5x167x160xbf16, #tpu.memory_space<vmem>>, vector<1x167x160xbf16>
    %31 = vector.shape_cast %30 : vector<1x167x160xbf16> to vector<167x160xbf16>
    %cst_21 = arith.constant dense<0.000000e+00> : vector<10x160xf32>
    %32 = tpu.matmul %29, %31, %cst_21 {dimension_numbers = #tpu.dot_dimension_numbers<[1], [0], [0], [1], [0, 0, 1, 1], [], []>} : vector<10x167xbf16>, vector<167x160xbf16>, vector<10x160xf32> -> vector<10x160xf32>
    %33 = arith.addf %28, %32 : vector<10x160xf32>
    %34 = vector.extract_strided_slice %19 {offsets = [3, 0], sizes = [10, 167], strides = [1, 1]} : vector<14x167xbf16> to vector<10x167xbf16>
    %c3 = arith.constant 3 : index
    %c0_22 = arith.constant 0 : index
    %c0_23 = arith.constant 0 : index
    %35 = vector.load %arg6[%c3, %c0_22, %c0_23] : memref<5x167x160xbf16, #tpu.memory_space<vmem>>, vector<1x167x160xbf16>
    %36 = vector.shape_cast %35 : vector<1x167x160xbf16> to vector<167x160xbf16>
    %cst_24 = arith.constant dense<0.000000e+00> : vector<10x160xf32>
    %37 = tpu.matmul %34, %36, %cst_24 {dimension_numbers = #tpu.dot_dimension_numbers<[1], [0], [0], [1], [0, 0, 1, 1], [], []>} : vector<10x167xbf16>, vector<167x160xbf16>, vector<10x160xf32> -> vector<10x160xf32>
    %38 = arith.addf %33, %37 : vector<10x160xf32>
    %39 = vector.extract_strided_slice %19 {offsets = [4, 0], sizes = [10, 167], strides = [1, 1]} : vector<14x167xbf16> to vector<10x167xbf16>
    %c4 = arith.constant 4 : index
    %c0_25 = arith.constant 0 : index
    %c0_26 = arith.constant 0 : index
    %40 = vector.load %arg6[%c4, %c0_25, %c0_26] : memref<5x167x160xbf16, #tpu.memory_space<vmem>>, vector<1x167x160xbf16>
    %41 = vector.shape_cast %40 : vector<1x167x160xbf16> to vector<167x160xbf16>
    %cst_27 = arith.constant dense<0.000000e+00> : vector<10x160xf32>
    %42 = tpu.matmul %39, %41, %cst_27 {dimension_numbers = #tpu.dot_dimension_numbers<[1], [0], [0], [1], [0, 0, 1, 1], [], []>} : vector<10x167xbf16>, vector<167x160xbf16>, vector<10x160xf32> -> vector<10x160xf32>
    %43 = arith.addf %38, %42 : vector<10x160xf32>
    %c0_28 = arith.constant 0 : index
    %c0_29 = arith.constant 0 : index
    %44 = vector.load %arg7[%c0_28, %c0_29] : memref<1x160xf32, #tpu.memory_space<vmem>>, vector<1x160xf32>
    %45 = vector.broadcast %44 : vector<1x160xf32> to vector<10x160xf32>
    %46 = arith.addf %43, %45 : vector<10x160xf32>
    %cst_30 = arith.constant 0.000000e+00 : f32
    %47 = vector.broadcast %cst_30 : f32 to vector<10x160xf32>
    %48 = arith.maximumf %46, %47 : vector<10x160xf32>
    %49 = vector.extract_strided_slice %48 {offsets = [0, 0], sizes = [10, 159], strides = [1, 1]} : vector<10x160xf32> to vector<10x159xf32>
    %50 = vector.extract_strided_slice %48 {offsets = [0, 1], sizes = [10, 159], strides = [1, 1]} : vector<10x160xf32> to vector<10x159xf32>
    %51 = arith.maximumf %49, %50 : vector<10x159xf32>
    %52 = arith.truncf %51 : vector<10x159xf32> to vector<10x159xbf16>
    %c0_31 = arith.constant 0 : index
    %c0_32 = arith.constant 0 : index
    %53 = vector.load %arg8[%c0_31, %c0_32] : memref<5x10xbf16, #tpu.memory_space<vmem>>, vector<5x10xbf16>
    %cst_33 = arith.constant dense<0.000000e+00> : vector<5x159xf32>
    %54 = tpu.matmul %53, %52, %cst_33 {dimension_numbers = #tpu.dot_dimension_numbers<[1], [0], [0], [1], [0, 0, 1, 1], [], []>} : vector<5x10xbf16>, vector<10x159xbf16>, vector<5x159xf32> -> vector<5x159xf32>
    %c0_34 = arith.constant 0 : index
    %c0_35 = arith.constant 0 : index
    %55 = vector.load %arg9[%c0_34, %c0_35] : memref<5x10xbf16, #tpu.memory_space<vmem>>, vector<5x10xbf16>
    %cst_36 = arith.constant dense<0.000000e+00> : vector<5x159xf32>
    %56 = tpu.matmul %55, %52, %cst_36 {dimension_numbers = #tpu.dot_dimension_numbers<[1], [0], [0], [1], [0, 0, 1, 1], [], []>} : vector<5x10xbf16>, vector<10x159xbf16>, vector<5x159xf32> -> vector<5x159xf32>
    %57 = arith.maximumf %54, %56 : vector<5x159xf32>
    %58 = vector.extract_strided_slice %57 {offsets = [0, 0], sizes = [1, 159], strides = [1, 1]} : vector<5x159xf32> to vector<1x159xf32>
    %c0_37 = arith.constant 0 : index
    %59 = arith.index_cast %c0_i32 : i32 to index
    %c0_38 = arith.constant 0 : index
    %60 = vector.load %arg17[%c0_37, %59, %c0_38] : memref<5x1x159xf32, #tpu.memory_space<vmem>>, vector<1x1x159xf32>
    %61 = vector.shape_cast %60 : vector<1x1x159xf32> to vector<1x159xf32>
    %62 = vector.shape_cast %58 : vector<1x159xf32> to vector<1x1x159xf32>
    tpu.vector_store %arg17[%c0_37, %59, %c0_38], %62 {strides = array<i32>} : memref<5x1x159xf32, #tpu.memory_space<vmem>>, vector<1x1x159xf32>,
    %63 = vector.extract_strided_slice %57 {offsets = [1, 0], sizes = [1, 159], strides = [1, 1]} : vector<5x159xf32> to vector<1x159xf32>
    %c1_39 = arith.constant 1 : index
    %64 = arith.index_cast %c0_i32 : i32 to index
    %c0_40 = arith.constant 0 : index
    %65 = vector.load %arg17[%c1_39, %64, %c0_40] : memref<5x1x159xf32, #tpu.memory_space<vmem>>, vector<1x1x159xf32>
    %66 = vector.shape_cast %65 : vector<1x1x159xf32> to vector<1x159xf32>
    %67 = vector.shape_cast %63 : vector<1x159xf32> to vector<1x1x159xf32>
    tpu.vector_store %arg17[%c1_39, %64, %c0_40], %67 {strides = array<i32>} : memref<5x1x159xf32, #tpu.memory_space<vmem>>, vector<1x1x159xf32>,
    %68 = vector.extract_strided_slice %57 {offsets = [2, 0], sizes = [1, 159], strides = [1, 1]} : vector<5x159xf32> to vector<1x159xf32>
    %c2_41 = arith.constant 2 : index
    %69 = arith.index_cast %c0_i32 : i32 to index
    %c0_42 = arith.constant 0 : index
    %70 = vector.load %arg17[%c2_41, %69, %c0_42] : memref<5x1x159xf32, #tpu.memory_space<vmem>>, vector<1x1x159xf32>
    %71 = vector.shape_cast %70 : vector<1x1x159xf32> to vector<1x159xf32>
    %72 = vector.shape_cast %68 : vector<1x159xf32> to vector<1x1x159xf32>
    tpu.vector_store %arg17[%c2_41, %69, %c0_42], %72 {strides = array<i32>} : memref<5x1x159xf32, #tpu.memory_space<vmem>>, vector<1x1x159xf32>,
    %73 = vector.extract_strided_slice %57 {offsets = [3, 0], sizes = [1, 159], strides = [1, 1]} : vector<5x159xf32> to vector<1x159xf32>
    %c3_43 = arith.constant 3 : index
    %74 = arith.index_cast %c0_i32 : i32 to index
    %c0_44 = arith.constant 0 : index
    %75 = vector.load %arg17[%c3_43, %74, %c0_44] : memref<5x1x159xf32, #tpu.memory_space<vmem>>, vector<1x1x159xf32>
    %76 = vector.shape_cast %75 : vector<1x1x159xf32> to vector<1x159xf32>
    %77 = vector.shape_cast %73 : vector<1x159xf32> to vector<1x1x159xf32>
    tpu.vector_store %arg17[%c3_43, %74, %c0_44], %77 {strides = array<i32>} : memref<5x1x159xf32, #tpu.memory_space<vmem>>, vector<1x1x159xf32>,
    %78 = vector.extract_strided_slice %57 {offsets = [4, 0], sizes = [1, 159], strides = [1, 1]} : vector<5x159xf32> to vector<1x159xf32>
    %c4_45 = arith.constant 4 : index
    %79 = arith.index_cast %c0_i32 : i32 to index
    %c0_46 = arith.constant 0 : index
    %80 = vector.load %arg17[%c4_45, %79, %c0_46] : memref<5x1x159xf32, #tpu.memory_space<vmem>>, vector<1x1x159xf32>
    %81 = vector.shape_cast %80 : vector<1x1x159xf32> to vector<1x159xf32>
    %82 = vector.shape_cast %78 : vector<1x159xf32> to vector<1x1x159xf32>
    tpu.vector_store %arg17[%c4_45, %79, %c0_46], %82 {strides = array<i32>} : memref<5x1x159xf32, #tpu.memory_space<vmem>>, vector<1x1x159xf32>,
    %c1_i32 = arith.constant 1 : i32
    %c0_47 = arith.constant 0 : index
    %c0_48 = arith.constant 0 : index
    %c0_49 = arith.constant 0 : index
    %83 = vector.load %arg17[%c0_47, %c0_48, %c0_49] : memref<5x1x159xf32, #tpu.memory_space<vmem>>, vector<1x1x159xf32>
    %84 = vector.shape_cast %83 : vector<1x1x159xf32> to vector<1x159xf32>
    %85 = arith.truncf %84 : vector<1x159xf32> to vector<1x159xbf16>
    %c0_50 = arith.constant 0 : index
    %c0_51 = arith.constant 0 : index
    %c0_52 = arith.constant 0 : index
    %86 = vector.load %arg10[%c0_50, %c0_51, %c0_52] : memref<5x159x120xbf16, #tpu.memory_space<vmem>>, vector<1x159x120xbf16>
    %87 = vector.shape_cast %86 : vector<1x159x120xbf16> to vector<159x120xbf16>
    %cst_53 = arith.constant dense<0.000000e+00> : vector<1x120xf32>
    %88 = tpu.matmul %85, %87, %cst_53 {dimension_numbers = #tpu.dot_dimension_numbers<[1], [0], [0], [1], [0, 0, 1, 1], [], []>} : vector<1x159xbf16>, vector<159x120xbf16>, vector<1x120xf32> -> vector<1x120xf32>
    %c1_54 = arith.constant 1 : index
    %c0_55 = arith.constant 0 : index
    %c0_56 = arith.constant 0 : index
    %89 = vector.load %arg17[%c1_54, %c0_55, %c0_56] : memref<5x1x159xf32, #tpu.memory_space<vmem>>, vector<1x1x159xf32>
    %90 = vector.shape_cast %89 : vector<1x1x159xf32> to vector<1x159xf32>
    %91 = arith.truncf %90 : vector<1x159xf32> to vector<1x159xbf16>
    %c1_57 = arith.constant 1 : index
    %c0_58 = arith.constant 0 : index
    %c0_59 = arith.constant 0 : index
    %92 = vector.load %arg10[%c1_57, %c0_58, %c0_59] : memref<5x159x120xbf16, #tpu.memory_space<vmem>>, vector<1x159x120xbf16>
    %93 = vector.shape_cast %92 : vector<1x159x120xbf16> to vector<159x120xbf16>
    %cst_60 = arith.constant dense<0.000000e+00> : vector<1x120xf32>
    %94 = tpu.matmul %91, %93, %cst_60 {dimension_numbers = #tpu.dot_dimension_numbers<[1], [0], [0], [1], [0, 0, 1, 1], [], []>} : vector<1x159xbf16>, vector<159x120xbf16>, vector<1x120xf32> -> vector<1x120xf32>
    %95 = arith.addf %88, %94 : vector<1x120xf32>
    %c2_61 = arith.constant 2 : index
    %c0_62 = arith.constant 0 : index
    %c0_63 = arith.constant 0 : index
    %96 = vector.load %arg17[%c2_61, %c0_62, %c0_63] : memref<5x1x159xf32, #tpu.memory_space<vmem>>, vector<1x1x159xf32>
    %97 = vector.shape_cast %96 : vector<1x1x159xf32> to vector<1x159xf32>
    %98 = arith.truncf %97 : vector<1x159xf32> to vector<1x159xbf16>
    %c2_64 = arith.constant 2 : index
    %c0_65 = arith.constant 0 : index
    %c0_66 = arith.constant 0 : index
    %99 = vector.load %arg10[%c2_64, %c0_65, %c0_66] : memref<5x159x120xbf16, #tpu.memory_space<vmem>>, vector<1x159x120xbf16>
    %100 = vector.shape_cast %99 : vector<1x159x120xbf16> to vector<159x120xbf16>
    %cst_67 = arith.constant dense<0.000000e+00> : vector<1x120xf32>
    %101 = tpu.matmul %98, %100, %cst_67 {dimension_numbers = #tpu.dot_dimension_numbers<[1], [0], [0], [1], [0, 0, 1, 1], [], []>} : vector<1x159xbf16>, vector<159x120xbf16>, vector<1x120xf32> -> vector<1x120xf32>
    %102 = arith.addf %95, %101 : vector<1x120xf32>
    %c3_68 = arith.constant 3 : index
    %c0_69 = arith.constant 0 : index
    %c0_70 = arith.constant 0 : index
    %103 = vector.load %arg17[%c3_68, %c0_69, %c0_70] : memref<5x1x159xf32, #tpu.memory_space<vmem>>, vector<1x1x159xf32>
    %104 = vector.shape_cast %103 : vector<1x1x159xf32> to vector<1x159xf32>
    %105 = arith.truncf %104 : vector<1x159xf32> to vector<1x159xbf16>
    %c3_71 = arith.constant 3 : index
    %c0_72 = arith.constant 0 : index
    %c0_73 = arith.constant 0 : index
    %106 = vector.load %arg10[%c3_71, %c0_72, %c0_73] : memref<5x159x120xbf16, #tpu.memory_space<vmem>>, vector<1x159x120xbf16>
    %107 = vector.shape_cast %106 : vector<1x159x120xbf16> to vector<159x120xbf16>
    %cst_74 = arith.constant dense<0.000000e+00> : vector<1x120xf32>
    %108 = tpu.matmul %105, %107, %cst_74 {dimension_numbers = #tpu.dot_dimension_numbers<[1], [0], [0], [1], [0, 0, 1, 1], [], []>} : vector<1x159xbf16>, vector<159x120xbf16>, vector<1x120xf32> -> vector<1x120xf32>
    %109 = arith.addf %102, %108 : vector<1x120xf32>
    %c4_75 = arith.constant 4 : index
    %c0_76 = arith.constant 0 : index
    %c0_77 = arith.constant 0 : index
    %110 = vector.load %arg17[%c4_75, %c0_76, %c0_77] : memref<5x1x159xf32, #tpu.memory_space<vmem>>, vector<1x1x159xf32>
    %111 = vector.shape_cast %110 : vector<1x1x159xf32> to vector<1x159xf32>
    %112 = arith.truncf %111 : vector<1x159xf32> to vector<1x159xbf16>
    %c4_78 = arith.constant 4 : index
    %c0_79 = arith.constant 0 : index
    %c0_80 = arith.constant 0 : index
    %113 = vector.load %arg10[%c4_78, %c0_79, %c0_80] : memref<5x159x120xbf16, #tpu.memory_space<vmem>>, vector<1x159x120xbf16>
    %114 = vector.shape_cast %113 : vector<1x159x120xbf16> to vector<159x120xbf16>
    %cst_81 = arith.constant dense<0.000000e+00> : vector<1x120xf32>
    %115 = tpu.matmul %112, %114, %cst_81 {dimension_numbers = #tpu.dot_dimension_numbers<[1], [0], [0], [1], [0, 0, 1, 1], [], []>} : vector<1x159xbf16>, vector<159x120xbf16>, vector<1x120xf32> -> vector<1x120xf32>
    %116 = arith.addf %109, %115 : vector<1x120xf32>
    %c0_82 = arith.constant 0 : index
    %c0_83 = arith.constant 0 : index
    %117 = vector.load %arg11[%c0_82, %c0_83] : memref<1x120xf32, #tpu.memory_space<vmem>>, vector<1x120xf32>
    %118 = arith.addf %116, %117 : vector<1x120xf32>
    %cst_84 = arith.constant 0.000000e+00 : f32
    %119 = vector.broadcast %cst_84 : f32 to vector<1x120xf32>
    %120 = arith.maximumf %118, %119 : vector<1x120xf32>
    %121 = arith.truncf %120 : vector<1x120xf32> to vector<1x120xbf16>
    %c0_85 = arith.constant 0 : index
    %c0_86 = arith.constant 0 : index
    %122 = vector.load %arg12[%c0_85, %c0_86] : memref<120x84xbf16, #tpu.memory_space<vmem>>, vector<120x84xbf16>
    %cst_87 = arith.constant dense<0.000000e+00> : vector<1x84xf32>
    %123 = tpu.matmul %121, %122, %cst_87 {dimension_numbers = #tpu.dot_dimension_numbers<[1], [0], [0], [1], [0, 0, 1, 1], [], []>} : vector<1x120xbf16>, vector<120x84xbf16>, vector<1x84xf32> -> vector<1x84xf32>
    %c0_88 = arith.constant 0 : index
    %c0_89 = arith.constant 0 : index
    %124 = vector.load %arg13[%c0_88, %c0_89] : memref<1x84xf32, #tpu.memory_space<vmem>>, vector<1x84xf32>
    %125 = arith.addf %123, %124 : vector<1x84xf32>
    %cst_90 = arith.constant 0.000000e+00 : f32
    %126 = vector.broadcast %cst_90 : f32 to vector<1x84xf32>
    %127 = arith.maximumf %125, %126 : vector<1x84xf32>
    %128 = arith.truncf %127 : vector<1x84xf32> to vector<1x84xbf16>
    %c0_91 = arith.constant 0 : index
    %c0_92 = arith.constant 0 : index
    %129 = vector.load %arg14[%c0_91, %c0_92] : memref<84x128xbf16, #tpu.memory_space<vmem>>, vector<84x128xbf16>
    %cst_93 = arith.constant dense<0.000000e+00> : vector<1x128xf32>
    %130 = tpu.matmul %128, %129, %cst_93 {dimension_numbers = #tpu.dot_dimension_numbers<[1], [0], [0], [1], [0, 0, 1, 1], [], []>} : vector<1x84xbf16>, vector<84x128xbf16>, vector<1x128xf32> -> vector<1x128xf32>
    %c0_94 = arith.constant 0 : index
    %c0_95 = arith.constant 0 : index
    %131 = vector.load %arg15[%c0_94, %c0_95] : memref<1x128xf32, #tpu.memory_space<vmem>>, vector<1x128xf32>
    %132 = arith.addf %130, %131 : vector<1x128xf32>
    %c0_96 = arith.constant 0 : index
    %c0_97 = arith.constant 0 : index
    %c0_98 = arith.constant 0 : index
    %133 = vector.load %arg16[%c0_96, %c0_97, %c0_98] : memref<1x1x128xf32, #tpu.memory_space<vmem>>, vector<1x1x128xf32>
    %134 = vector.shape_cast %133 : vector<1x1x128xf32> to vector<1x128xf32>
    %135 = vector.shape_cast %132 : vector<1x128xf32> to vector<1x1x128xf32>
    tpu.vector_store %arg16[%c0_96, %c0_97, %c0_98], %135 {strides = array<i32>} : memref<1x1x128xf32, #tpu.memory_space<vmem>>, vector<1x1x128xf32>,
    return
  }
  func.func @transform_0(%arg0: i32) -> (i32, i32, i32) {
    %c0_i32 = arith.constant 0 : i32
    %c0_i32_0 = arith.constant 0 : i32
    %c0_i32_1 = arith.constant 0 : i32
    return %arg0, %c0_i32, %c0_i32_0 : i32, i32, i32
  }
  func.func @transform_1(%arg0: i32) -> (i32, i32) {
    %c0_i32 = arith.constant 0 : i32
    %c0_i32_0 = arith.constant 0 : i32
    %c0_i32_1 = arith.constant 0 : i32
    return %c0_i32, %c0_i32_0 : i32, i32
  }
  func.func @transform_2(%arg0: i32) -> (i32, i32) {
    %c0_i32 = arith.constant 0 : i32
    %c0_i32_0 = arith.constant 0 : i32
    %c0_i32_1 = arith.constant 0 : i32
    return %c0_i32, %c0_i32_0 : i32, i32
  }
  func.func @transform_3(%arg0: i32) -> (i32, i32) {
    %c0_i32 = arith.constant 0 : i32
    %c0_i32_0 = arith.constant 0 : i32
    %c0_i32_1 = arith.constant 0 : i32
    return %c0_i32, %c0_i32_0 : i32, i32
  }
  func.func @transform_4(%arg0: i32) -> (i32, i32) {
    %c0_i32 = arith.constant 0 : i32
    %c0_i32_0 = arith.constant 0 : i32
    %c0_i32_1 = arith.constant 0 : i32
    return %c0_i32, %c0_i32_0 : i32, i32
  }
  func.func @transform_5(%arg0: i32) -> (i32, i32, i32) {
    %c0_i32 = arith.constant 0 : i32
    %c0_i32_0 = arith.constant 0 : i32
    %c0_i32_1 = arith.constant 0 : i32
    %c0_i32_2 = arith.constant 0 : i32
    return %c0_i32, %c0_i32_0, %c0_i32_1 : i32, i32, i32
  }
  func.func @transform_6(%arg0: i32) -> (i32, i32) {
    %c0_i32 = arith.constant 0 : i32
    %c0_i32_0 = arith.constant 0 : i32
    %c0_i32_1 = arith.constant 0 : i32
    return %c0_i32, %c0_i32_0 : i32, i32
  }
  func.func @transform_7(%arg0: i32) -> (i32, i32) {
    %c0_i32 = arith.constant 0 : i32
    %c0_i32_0 = arith.constant 0 : i32
    %c0_i32_1 = arith.constant 0 : i32
    return %c0_i32, %c0_i32_0 : i32, i32
  }
  func.func @transform_8(%arg0: i32) -> (i32, i32) {
    %c0_i32 = arith.constant 0 : i32
    %c0_i32_0 = arith.constant 0 : i32
    %c0_i32_1 = arith.constant 0 : i32
    return %c0_i32, %c0_i32_0 : i32, i32
  }
  func.func @transform_9(%arg0: i32) -> (i32, i32, i32) {
    %c0_i32 = arith.constant 0 : i32
    %c0_i32_0 = arith.constant 0 : i32
    %c0_i32_1 = arith.constant 0 : i32
    %c0_i32_2 = arith.constant 0 : i32
    return %c0_i32, %c0_i32_0, %c0_i32_1 : i32, i32, i32
  }
  func.func @transform_10(%arg0: i32) -> (i32, i32) {
    %c0_i32 = arith.constant 0 : i32
    %c0_i32_0 = arith.constant 0 : i32
    %c0_i32_1 = arith.constant 0 : i32
    return %c0_i32, %c0_i32_0 : i32, i32
  }
  func.func @transform_11(%arg0: i32) -> (i32, i32) {
    %c0_i32 = arith.constant 0 : i32
    %c0_i32_0 = arith.constant 0 : i32
    %c0_i32_1 = arith.constant 0 : i32
    return %c0_i32, %c0_i32_0 : i32, i32
  }
  func.func @transform_12(%arg0: i32) -> (i32, i32) {
    %c0_i32 = arith.constant 0 : i32
    %c0_i32_0 = arith.constant 0 : i32
    %c0_i32_1 = arith.constant 0 : i32
    return %c0_i32, %c0_i32_0 : i32, i32
  }
  func.func @transform_13(%arg0: i32) -> (i32, i32) {
    %c0_i32 = arith.constant 0 : i32
    %c0_i32_0 = arith.constant 0 : i32
    %c0_i32_1 = arith.constant 0 : i32
    return %c0_i32, %c0_i32_0 : i32, i32
  }
  func.func @transform_14(%arg0: i32) -> (i32, i32) {
    %c0_i32 = arith.constant 0 : i32
    %c0_i32_0 = arith.constant 0 : i32
    %c0_i32_1 = arith.constant 0 : i32
    return %c0_i32, %c0_i32_0 : i32, i32
  }
  func.func @transform_15(%arg0: i32) -> (i32, i32, i32) {
    %c0_i32 = arith.constant 0 : i32
    %c0_i32_0 = arith.constant 0 : i32
    %c0_i32_1 = arith.constant 0 : i32
    return %arg0, %c0_i32, %c0_i32_0 : i32, i32, i32
  }
}

</mosaic_0001>

<llo_original>
// kernel: lenet5_forward.1
$region0: #{lenet5_forward.1}
  #allocation0 [shape = 'u32[]', space=smem, size = 0x4, offset = 0x4, fixed_abs, tag = 'smem constant byte address 0x4 - core index']
  #allocation1 [shape = 'u32[144,128]{1,0:T(1,128)}', space=vmem, size = 0x12000, scoped, tag = 'internal scratch']
  #allocation2 [shape = 'f32[5,1,159]{2,1,0:T(1,128)}', space=vmem, size = 0x1400, scoped, tag = 'scratch operand']
  %s0 = inlined_call_operand.vmem [shape: bf16[2,28,160], index: 0, kind: input, shape index: {}]
  %s1 = inlined_call_operand.vmem [shape: bf16[160,168], index: 1, kind: input, shape index: {}]
  %s2 = inlined_call_operand.vmem [shape: f32[1,168], index: 2, kind: input, shape index: {}]
  %s3 = inlined_call_operand.vmem [shape: bf16[14,28], index: 3, kind: input, shape index: {}]
  %s4 = inlined_call_operand.vmem [shape: bf16[14,28], index: 4, kind: input, shape index: {}]
  %s5 = inlined_call_operand.vmem [shape: bf16[5,167,160], index: 5, kind: input, shape index: {}]
  %s6 = inlined_call_operand.vmem [shape: f32[1,160], index: 6, kind: input, shape index: {}]
  %s7 = inlined_call_operand.vmem [shape: bf16[5,10], index: 7, kind: input, shape index: {}]
  %s8 = inlined_call_operand.vmem [shape: bf16[5,10], index: 8, kind: input, shape index: {}]
  %s9 = inlined_call_operand.vmem [shape: bf16[5,159,120], index: 9, kind: input, shape index: {}]
  %s10 = inlined_call_operand.vmem [shape: f32[1,120], index: 10, kind: input, shape index: {}]
  %s11 = inlined_call_operand.vmem [shape: bf16[120,84], index: 11, kind: input, shape index: {}]
  %s12 = inlined_call_operand.vmem [shape: f32[1,84], index: 12, kind: input, shape index: {}]
  %s13 = inlined_call_operand.vmem [shape: bf16[84,128], index: 13, kind: input, shape index: {}]
  %s14 = inlined_call_operand.vmem [shape: f32[1,128], index: 14, kind: input, shape index: {}]
  %s15 = inlined_call_operand.hbm [shape: f32[2,1,128], index: 15, kind: output, shape index: {}]
  %s16 = sld [smem:[#allocation0]]
  $region93: #{lenet5_forward.1} parent=0
    _
  %s18 = ssub.s32 1, %s16
  %s19 = scalar_select 0, %s18, %s16
  $region1: #{lenet5_forward.1} parent=0
    #allocation3 [shape = 'u8[1024]{0}', space=vmem, size = 0x400, scoped, tag = 'output window, operand 0']
    #allocation4 [shape = 's32[2]{0}', space=sflag, size = 0x8, scoped, tag = 'scoped memory for lenet5_forward.1']
    %20 = vsyncpa [#allocation4], 0
    %s21 = scalar_lea.sflag [#allocation4], 1
    %22 = vsyncpa %s21, 0
    loop: start=0, step=1, limit=4
    $region2: #{lenet5_forward.1} parent=1 // loop_pre_header
      _
    $region3: #{lenet5_forward.1} parent=1 // loop_header
      %s24 = sphi 0, %s28
      %p25 = scmp.ge.s32.totalorder %s24, 4
      %s34 = sphi 0, %s36
      %s37 = sphi 0, %s34
      %s38 = sphi 0, %s37
      %s54 = sphi 0, %s38
      %s58 = sphi 0, %s58
      %s60 = sphi 0, %s58
      %s61 = sphi 0, %s60
      %s75 = sphi 0, %s61
      %s79 = sphi 0, %s79
      %s81 = sphi 0, %s79
      %s82 = sphi 0, %s81
      %s96 = sphi 0, %s82
      %s100 = sphi 0, %s100
      %s102 = sphi 0, %s100
      %s103 = sphi 0, %s102
      %s117 = sphi 0, %s103
      %s121 = sphi 0, %s121
      %s123 = sphi 0, %s121
      %s124 = sphi 0, %s123
      %s138 = sphi 0, %s124
      %s142 = sphi 0, %s142
      %s144 = sphi 0, %s142
      %s145 = sphi 0, %s144
      %s159 = sphi 0, %s145
      %s163 = sphi 0, %s163
      %s165 = sphi 0, %s163
      %s166 = sphi 0, %s165
      %s180 = sphi 0, %s166
      %s184 = sphi 0, %s184
      %s186 = sphi 0, %s184
      %s187 = sphi 0, %s186
      %s201 = sphi 0, %s187
      %s205 = sphi 0, %s205
      %s207 = sphi 0, %s205
      %s208 = sphi 0, %s207
      %s222 = sphi 0, %s208
      %s226 = sphi 0, %s226
      %s228 = sphi 0, %s226
      %s229 = sphi 0, %s228
      %s243 = sphi 0, %s229
      %s247 = sphi 0, %s247
      %s249 = sphi 0, %s247
      %s250 = sphi 0, %s249
      %s264 = sphi 0, %s250
      %s268 = sphi 0, %s268
      %s270 = sphi 0, %s268
      %s271 = sphi 0, %s270
      %s285 = sphi 0, %s271
      %s289 = sphi 0, %s289
      %s291 = sphi 0, %s289
      %s292 = sphi 0, %s291
      %s306 = sphi 0, %s292
      %s310 = sphi 0, %s310
      %s312 = sphi 0, %s310
      %s313 = sphi 0, %s312
      %s327 = sphi 0, %s313
      %s331 = sphi 0, %s331
      %s333 = sphi 0, %s331
      %s334 = sphi 0, %s333
      %s348 = sphi 0, %s334
      %s354 = sphi 0, %s356
      %s357 = sphi 0, %s354
      %s358 = sphi 0, %s357
      %s374 = sphi 0, %s358
    $region4: #{lenet5_forward.1} parent=1 // loop_header_branch
      %27 = sbr.rel (%p25) target = $region8
    $region5: #{lenet5_forward.1} parent=1 // loop_body
      %s29 = ssub.s32 %s24, 1
      %s30 = ssub.s32 %s24, 2
      %s31 = sadd.s32 %s24, 1
      %s32 = ssub.s32 %s24, %s31
      %p33 = scmp.eq.s32.totalorder %s32, 0
      %s35 = sadd.s32 %s34, 1
      %s36 = scalar_select %p33, %s34, %s35
      %p39 = pneg %p33
      %p40 = scmp.eq.s32.totalorder %s24, 1
      %p41 = por %p39, %p40
      %p42 = scmp.ne.s32.totalorder %s34, %s37
      %p43 = scmp.eq.s32.totalorder %s24, 0
      %p44 = por %p42, %p43
      %p45 = scmp.ne.s32.totalorder %s34, %s37
      %p46 = scmp.eq.s32.totalorder %s29, 1
      %p47 = por %p45, %p46
      %p48 = scmp.ne.s32.totalorder %s37, %s38
      %p49 = scmp.eq.s32.totalorder %s29, 0
      %p50 = por %p48, %p49
      %p51 = scmp.ne.s32.totalorder %s37, %s38
      %p52 = scmp.eq.s32.totalorder %s30, 1
      %p53 = por %p51, %p52
      %p55 = scmp.ne.s32.totalorder %s38, %s54
      %p56 = scmp.eq.s32.totalorder %s30, 0
      %p57 = por %p55, %p56
      %s59 = sadd.s32 %s58, 1
      %p62 = scmp.eq.s32.totalorder %s24, 1
      %p63 = scmp.ne.s32.totalorder %s58, %s60
      %p64 = scmp.eq.s32.totalorder %s24, 0
      %p65 = por %p63, %p64
      %p66 = scmp.ne.s32.totalorder %s58, %s60
      %p67 = scmp.eq.s32.totalorder %s29, 1
      %p68 = por %p66, %p67
      %p69 = scmp.ne.s32.totalorder %s60, %s61
      %p70 = scmp.eq.s32.totalorder %s29, 0
      %p71 = por %p69, %p70
      %p72 = scmp.ne.s32.totalorder %s60, %s61
      %p73 = scmp.eq.s32.totalorder %s30, 1
      %p74 = por %p72, %p73
      %p76 = scmp.ne.s32.totalorder %s61, %s75
      %p77 = scmp.eq.s32.totalorder %s30, 0
      %p78 = por %p76, %p77
      %s80 = sadd.s32 %s79, 1
      %p83 = scmp.eq.s32.totalorder %s24, 1
      %p84 = scmp.ne.s32.totalorder %s79, %s81
      %p85 = scmp.eq.s32.totalorder %s24, 0
      %p86 = por %p84, %p85
      %p87 = scmp.ne.s32.totalorder %s79, %s81
      %p88 = scmp.eq.s32.totalorder %s29, 1
      %p89 = por %p87, %p88
      %p90 = scmp.ne.s32.totalorder %s81, %s82
      %p91 = scmp.eq.s32.totalorder %s29, 0
      %p92 = por %p90, %p91
      %p93 = scmp.ne.s32.totalorder %s81, %s82
      %p94 = scmp.eq.s32.totalorder %s30, 1
      %p95 = por %p93, %p94
      %p97 = scmp.ne.s32.totalorder %s82, %s96
      %p98 = scmp.eq.s32.totalorder %s30, 0
      %p99 = por %p97, %p98
      %s101 = sadd.s32 %s100, 1
      %p104 = scmp.eq.s32.totalorder %s24, 1
      %p105 = scmp.ne.s32.totalorder %s100, %s102
      %p106 = scmp.eq.s32.totalorder %s24, 0
      %p107 = por %p105, %p106
      %p108 = scmp.ne.s32.totalorder %s100, %s102
      %p109 = scmp.eq.s32.totalorder %s29, 1
      %p110 = por %p108, %p109
      %p111 = scmp.ne.s32.totalorder %s102, %s103
      %p112 = scmp.eq.s32.totalorder %s29, 0
      %p113 = por %p111, %p112
      %p114 = scmp.ne.s32.totalorder %s102, %s103
      %p115 = scmp.eq.s32.totalorder %s30, 1
      %p116 = por %p114, %p115
      %p118 = scmp.ne.s32.totalorder %s103, %s117
      %p119 = scmp.eq.s32.totalorder %s30, 0
      %p120 = por %p118, %p119
      %s122 = sadd.s32 %s121, 1
      %p125 = scmp.eq.s32.totalorder %s24, 1
      %p126 = scmp.ne.s32.totalorder %s121, %s123
      %p127 = scmp.eq.s32.totalorder %s24, 0
      %p128 = por %p126, %p127
      %p129 = scmp.ne.s32.totalorder %s121, %s123
      %p130 = scmp.eq.s32.totalorder %s29, 1
      %p131 = por %p129, %p130
      %p132 = scmp.ne.s32.totalorder %s123, %s124
      %p133 = scmp.eq.s32.totalorder %s29, 0
      %p134 = por %p132, %p133
      %p135 = scmp.ne.s32.totalorder %s123, %s124
      %p136 = scmp.eq.s32.totalorder %s30, 1
      %p137 = por %p135, %p136
      %p139 = scmp.ne.s32.totalorder %s124, %s138
      %p140 = scmp.eq.s32.totalorder %s30, 0
      %p141 = por %p139, %p140
      %s143 = sadd.s32 %s142, 1
      %p146 = scmp.eq.s32.totalorder %s24, 1
      %p147 = scmp.ne.s32.totalorder %s142, %s144
      %p148 = scmp.eq.s32.totalorder %s24, 0
      %p149 = por %p147, %p148
      %p150 = scmp.ne.s32.totalorder %s142, %s144
      %p151 = scmp.eq.s32.totalorder %s29, 1
      %p152 = por %p150, %p151
      %p153 = scmp.ne.s32.totalorder %s144, %s145
      %p154 = scmp.eq.s32.totalorder %s29, 0
      %p155 = por %p153, %p154
      %p156 = scmp.ne.s32.totalorder %s144, %s145
      %p157 = scmp.eq.s32.totalorder %s30, 1
      %p158 = por %p156, %p157
      %p160 = scmp.ne.s32.totalorder %s145, %s159
      %p161 = scmp.eq.s32.totalorder %s30, 0
      %p162 = por %p160, %p161
      %s164 = sadd.s32 %s163, 1
      %p167 = scmp.eq.s32.totalorder %s24, 1
      %p168 = scmp.ne.s32.totalorder %s163, %s165
      %p169 = scmp.eq.s32.totalorder %s24, 0
      %p170 = por %p168, %p169
      %p171 = scmp.ne.s32.totalorder %s163, %s165
      %p172 = scmp.eq.s32.totalorder %s29, 1
      %p173 = por %p171, %p172
      %p174 = scmp.ne.s32.totalorder %s165, %s166
      %p175 = scmp.eq.s32.totalorder %s29, 0
      %p176 = por %p174, %p175
      %p177 = scmp.ne.s32.totalorder %s165, %s166
      %p178 = scmp.eq.s32.totalorder %s30, 1
      %p179 = por %p177, %p178
      %p181 = scmp.ne.s32.totalorder %s166, %s180
      %p182 = scmp.eq.s32.totalorder %s30, 0
      %p183 = por %p181, %p182
      %s185 = sadd.s32 %s184, 1
      %p188 = scmp.eq.s32.totalorder %s24, 1
      %p189 = scmp.ne.s32.totalorder %s184, %s186
      %p190 = scmp.eq.s32.totalorder %s24, 0
      %p191 = por %p189, %p190
      %p192 = scmp.ne.s32.totalorder %s184, %s186
      %p193 = scmp.eq.s32.totalorder %s29, 1
      %p194 = por %p192, %p193
      %p195 = scmp.ne.s32.totalorder %s186, %s187
      %p196 = scmp.eq.s32.totalorder %s29, 0
      %p197 = por %p195, %p196
      %p198 = scmp.ne.s32.totalorder %s186, %s187
      %p199 = scmp.eq.s32.totalorder %s30, 1
      %p200 = por %p198, %p199
      %p202 = scmp.ne.s32.totalorder %s187, %s201
      %p203 = scmp.eq.s32.totalorder %s30, 0
      %p204 = por %p202, %p203
      %s206 = sadd.s32 %s205, 1
      %p209 = scmp.eq.s32.totalorder %s24, 1
      %p210 = scmp.ne.s32.totalorder %s205, %s207
      %p211 = scmp.eq.s32.totalorder %s24, 0
      %p212 = por %p210, %p211
      %p213 = scmp.ne.s32.totalorder %s205, %s207
      %p214 = scmp.eq.s32.totalorder %s29, 1
      %p215 = por %p213, %p214
      %p216 = scmp.ne.s32.totalorder %s207, %s208
      %p217 = scmp.eq.s32.totalorder %s29, 0
      %p218 = por %p216, %p217
      %p219 = scmp.ne.s32.totalorder %s207, %s208
      %p220 = scmp.eq.s32.totalorder %s30, 1
      %p221 = por %p219, %p220
      %p223 = scmp.ne.s32.totalorder %s208, %s222
      %p224 = scmp.eq.s32.totalorder %s30, 0
      %p225 = por %p223, %p224
      %s227 = sadd.s32 %s226, 1
      %p230 = scmp.eq.s32.totalorder %s24, 1
      %p231 = scmp.ne.s32.totalorder %s226, %s228
      %p232 = scmp.eq.s32.totalorder %s24, 0
      %p233 = por %p231, %p232
      %p234 = scmp.ne.s32.totalorder %s226, %s228
      %p235 = scmp.eq.s32.totalorder %s29, 1
      %p236 = por %p234, %p235
      %p237 = scmp.ne.s32.totalorder %s228, %s229
      %p238 = scmp.eq.s32.totalorder %s29, 0
      %p239 = por %p237, %p238
      %p240 = scmp.ne.s32.totalorder %s228, %s229
      %p241 = scmp.eq.s32.totalorder %s30, 1
      %p242 = por %p240, %p241
      %p244 = scmp.ne.s32.totalorder %s229, %s243
      %p245 = scmp.eq.s32.totalorder %s30, 0
      %p246 = por %p244, %p245
      %s248 = sadd.s32 %s247, 1
      %p251 = scmp.eq.s32.totalorder %s24, 1
      %p252 = scmp.ne.s32.totalorder %s247, %s249
      %p253 = scmp.eq.s32.totalorder %s24, 0
      %p254 = por %p252, %p253
      %p255 = scmp.ne.s32.totalorder %s247, %s249
      %p256 = scmp.eq.s32.totalorder %s29, 1
      %p257 = por %p255, %p256
      %p258 = scmp.ne.s32.totalorder %s249, %s250
      %p259 = scmp.eq.s32.totalorder %s29, 0
      %p260 = por %p258, %p259
      %p261 = scmp.ne.s32.totalorder %s249, %s250
      %p262 = scmp.eq.s32.totalorder %s30, 1
      %p263 = por %p261, %p262
      %p265 = scmp.ne.s32.totalorder %s250, %s264
      %p266 = scmp.eq.s32.totalorder %s30, 0
      %p267 = por %p265, %p266
      %s269 = sadd.s32 %s268, 1
      %p272 = scmp.eq.s32.totalorder %s24, 1
      %p273 = scmp.ne.s32.totalorder %s268, %s270
      %p274 = scmp.eq.s32.totalorder %s24, 0
      %p275 = por %p273, %p274
      %p276 = scmp.ne.s32.totalorder %s268, %s270
      %p277 = scmp.eq.s32.totalorder %s29, 1
      %p278 = por %p276, %p277
      %p279 = scmp.ne.s32.totalorder %s270, %s271
      %p280 = scmp.eq.s32.totalorder %s29, 0
      %p281 = por %p279, %p280
      %p282 = scmp.ne.s32.totalorder %s270, %s271
      %p283 = scmp.eq.s32.totalorder %s30, 1
      %p284 = por %p282, %p283
      %p286 = scmp.ne.s32.totalorder %s271, %s285
      %p287 = scmp.eq.s32.totalorder %s30, 0
      %p288 = por %p286, %p287
      %s290 = sadd.s32 %s289, 1
      %p293 = scmp.eq.s32.totalorder %s24, 1
      %p294 = scmp.ne.s32.totalorder %s289, %s291
      %p295 = scmp.eq.s32.totalorder %s24, 0
      %p296 = por %p294, %p295
      %p297 = scmp.ne.s32.totalorder %s289, %s291
      %p298 = scmp.eq.s32.totalorder %s29, 1
      %p299 = por %p297, %p298
      %p300 = scmp.ne.s32.totalorder %s291, %s292
      %p301 = scmp.eq.s32.totalorder %s29, 0
      %p302 = por %p300, %p301
      %p303 = scmp.ne.s32.totalorder %s291, %s292
      %p304 = scmp.eq.s32.totalorder %s30, 1
      %p305 = por %p303, %p304
      %p307 = scmp.ne.s32.totalorder %s292, %s306
      %p308 = scmp.eq.s32.totalorder %s30, 0
      %p309 = por %p307, %p308
      %s311 = sadd.s32 %s310, 1
      %p314 = scmp.eq.s32.totalorder %s24, 1
      %p315 = scmp.ne.s32.totalorder %s310, %s312
      %p316 = scmp.eq.s32.totalorder %s24, 0
      %p317 = por %p315, %p316
      %p318 = scmp.ne.s32.totalorder %s310, %s312
      %p319 = scmp.eq.s32.totalorder %s29, 1
      %p320 = por %p318, %p319
      %p321 = scmp.ne.s32.totalorder %s312, %s313
      %p322 = scmp.eq.s32.totalorder %s29, 0
      %p323 = por %p321, %p322
      %p324 = scmp.ne.s32.totalorder %s312, %s313
      %p325 = scmp.eq.s32.totalorder %s30, 1
      %p326 = por %p324, %p325
      %p328 = scmp.ne.s32.totalorder %s313, %s327
      %p329 = scmp.eq.s32.totalorder %s30, 0
      %p330 = por %p328, %p329
      %s332 = sadd.s32 %s331, 1
      %p335 = scmp.eq.s32.totalorder %s24, 1
      %p336 = scmp.ne.s32.totalorder %s331, %s333
      %p337 = scmp.eq.s32.totalorder %s24, 0
      %p338 = por %p336, %p337
      %p339 = scmp.ne.s32.totalorder %s331, %s333
      %p340 = scmp.eq.s32.totalorder %s29, 1
      %p341 = por %p339, %p340
      %p342 = scmp.ne.s32.totalorder %s333, %s334
      %p343 = scmp.eq.s32.totalorder %s29, 0
      %p344 = por %p342, %p343
      %p345 = scmp.ne.s32.totalorder %s333, %s334
      %p346 = scmp.eq.s32.totalorder %s30, 1
      %p347 = por %p345, %p346
      %p349 = scmp.ne.s32.totalorder %s334, %s348
      %p350 = scmp.eq.s32.totalorder %s30, 0
      %p351 = por %p349, %p350
      %s352 = ssub.s32 %s24, %s31
      %p353 = scmp.eq.s32.totalorder %s352, 0
      %s355 = sadd.s32 %s354, 1
      %s356 = scalar_select %p353, %s354, %s355
      %p359 = pneg %p353
      %p360 = scmp.eq.s32.totalorder %s24, 1
      %p361 = por %p359, %p360
      %p362 = scmp.ne.s32.totalorder %s354, %s357
      %p363 = scmp.eq.s32.totalorder %s24, 0
      %p364 = por %p362, %p363
      %p365 = scmp.ne.s32.totalorder %s354, %s357
      %p366 = scmp.eq.s32.totalorder %s29, 1
      %p367 = por %p365, %p366
      %p368 = scmp.ne.s32.totalorder %s357, %s358
      %p369 = scmp.eq.s32.totalorder %s29, 0
      %p370 = por %p368, %p369
      %p371 = scmp.ne.s32.totalorder %s357, %s358
      %p372 = scmp.eq.s32.totalorder %s30, 1
      %p373 = por %p371, %p372
      %p375 = scmp.ne.s32.totalorder %s358, %s374
      %p376 = scmp.eq.s32.totalorder %s30, 0
      %p377 = por %p375, %p376
      %p378 = scmp.le.s32.totalorder 1, %s24
      %p379 = scmp.lt.s32.totalorder %s24, 3
      %p380 = pnand %p378, %p379
      %p381 = pneg %p380
      // Predicated region
      $region9: #{lenet5_forward.1} parent=5 // pred_check
        _
      $region10: #{lenet5_forward.1} parent=5 // pred_check_branch
        %383 = sbr.rel (%p380) target = $region12
      $region11: #{lenet5_forward.1} parent=5 // pred_region
        %s384 = ssub.s32 %s24, 1
        // Predicated region
        $region13: #{lenet5_forward.1} parent=11 // pred_check
          %p385 = pneg %p71
        $region14: #{lenet5_forward.1} parent=11 // pred_check_branch
          %387 = sbr.rel (%p385) target = $region16
        $region15: #{lenet5_forward.1} parent=11 // pred_region
          _
        $region16: #{lenet5_forward.1} parent=11 // pred_fallthru
          _
        // Predicated region
        $region17: #{lenet5_forward.1} parent=11 // pred_check
          %p388 = pneg %p92
        $region18: #{lenet5_forward.1} parent=11 // pred_check_branch
          %390 = sbr.rel (%p388) target = $region20
        $region19: #{lenet5_forward.1} parent=11 // pred_region
          _
        $region20: #{lenet5_forward.1} parent=11 // pred_fallthru
          _
        // Predicated region
        $region21: #{lenet5_forward.1} parent=11 // pred_check
          %p391 = pneg %p113
        $region22: #{lenet5_forward.1} parent=11 // pred_check_branch
          %393 = sbr.rel (%p391) target = $region24
        $region23: #{lenet5_forward.1} parent=11 // pred_region
          _
        $region24: #{lenet5_forward.1} parent=11 // pred_fallthru
          _
        // Predicated region
        $region25: #{lenet5_forward.1} parent=11 // pred_check
          %p394 = pneg %p134
        $region26: #{lenet5_forward.1} parent=11 // pred_check_branch
          %396 = sbr.rel (%p394) target = $region28
        $region27: #{lenet5_forward.1} parent=11 // pred_region
          _
        $region28: #{lenet5_forward.1} parent=11 // pred_fallthru
          _
        // Predicated region
        $region29: #{lenet5_forward.1} parent=11 // pred_check
          %p397 = pneg %p155
        $region30: #{lenet5_forward.1} parent=11 // pred_check_branch
          %399 = sbr.rel (%p397) target = $region32
        $region31: #{lenet5_forward.1} parent=11 // pred_region
          _
        $region32: #{lenet5_forward.1} parent=11 // pred_fallthru
          _
        // Predicated region
        $region33: #{lenet5_forward.1} parent=11 // pred_check
          %p400 = pneg %p176
        $region34: #{lenet5_forward.1} parent=11 // pred_check_branch
          %402 = sbr.rel (%p400) target = $region36
        $region35: #{lenet5_forward.1} parent=11 // pred_region
          _
        $region36: #{lenet5_forward.1} parent=11 // pred_fallthru
          _
        // Predicated region
        $region37: #{lenet5_forward.1} parent=11 // pred_check
          %p403 = pneg %p197
        $region38: #{lenet5_forward.1} parent=11 // pred_check_branch
          %405 = sbr.rel (%p403) target = $region40
        $region39: #{lenet5_forward.1} parent=11 // pred_region
          _
        $region40: #{lenet5_forward.1} parent=11 // pred_fallthru
          _
        // Predicated region
        $region41: #{lenet5_forward.1} parent=11 // pred_check
          %p406 = pneg %p218
        $region42: #{lenet5_forward.1} parent=11 // pred_check_branch
          %408 = sbr.rel (%p406) target = $region44
        $region43: #{lenet5_forward.1} parent=11 // pred_region
          _
        $region44: #{lenet5_forward.1} parent=11 // pred_fallthru
          _
        // Predicated region
        $region45: #{lenet5_forward.1} parent=11 // pred_check
          %p409 = pneg %p239
        $region46: #{lenet5_forward.1} parent=11 // pred_check_branch
          %411 = sbr.rel (%p409) target = $region48
        $region47: #{lenet5_forward.1} parent=11 // pred_region
          _
        $region48: #{lenet5_forward.1} parent=11 // pred_fallthru
          _
        // Predicated region
        $region49: #{lenet5_forward.1} parent=11 // pred_check
          %p412 = pneg %p260
        $region50: #{lenet5_forward.1} parent=11 // pred_check_branch
          %414 = sbr.rel (%p412) target = $region52
        $region51: #{lenet5_forward.1} parent=11 // pred_region
          _
        $region52: #{lenet5_forward.1} parent=11 // pred_fallthru
          _
        // Predicated region
        $region53: #{lenet5_forward.1} parent=11 // pred_check
          %p415 = pneg %p281
        $region54: #{lenet5_forward.1} parent=11 // pred_check_branch
          %417 = sbr.rel (%p415) target = $region56
        $region55: #{lenet5_forward.1} parent=11 // pred_region
          _
        $region56: #{lenet5_forward.1} parent=11 // pred_fallthru
          _
        // Predicated region
        $region57: #{lenet5_forward.1} parent=11 // pred_check
          %p418 = pneg %p302
        $region58: #{lenet5_forward.1} parent=11 // pred_check_branch
          %420 = sbr.rel (%p418) target = $region60
        $region59: #{lenet5_forward.1} parent=11 // pred_region
          _
        $region60: #{lenet5_forward.1} parent=11 // pred_fallthru
          _
        // Predicated region
        $region61: #{lenet5_forward.1} parent=11 // pred_check
          %p421 = pneg %p323
        $region62: #{lenet5_forward.1} parent=11 // pred_check_branch
          %423 = sbr.rel (%p421) target = $region64
        $region63: #{lenet5_forward.1} parent=11 // pred_region
          _
        $region64: #{lenet5_forward.1} parent=11 // pred_fallthru
          _
        // Predicated region
        $region65: #{lenet5_forward.1} parent=11 // pred_check
          %p424 = pneg %p344
        $region66: #{lenet5_forward.1} parent=11 // pred_check_branch
          %426 = sbr.rel (%p424) target = $region68
        $region67: #{lenet5_forward.1} parent=11 // pred_region
          _
        $region68: #{lenet5_forward.1} parent=11 // pred_fallthru
          _
      $region12: #{lenet5_forward.1} parent=5 // pred_fallthru
        _
      %p427 = scmp.lt.s32.totalorder %s24, 2
      // Predicated region
      $region69: #{lenet5_forward.1} parent=5 // pred_check
        %p428 = pneg %p427
      $region70: #{lenet5_forward.1} parent=5 // pred_check_branch
        %430 = sbr.rel (%p428) target = $region72
      $region71: #{lenet5_forward.1} parent=5 // pred_region
        // Predicated region
        $region73: #{lenet5_forward.1} parent=71 // pred_check
          %p431 = pneg %p44
        $region74: #{lenet5_forward.1} parent=71 // pred_check_branch
          %433 = sbr.rel (%p431) target = $region76
        $region75: #{lenet5_forward.1} parent=71 // pred_region
          %p434 = scmp.lt.s32.totalorder %s24, 1
          %s435 = scalar_select %p434, %s24, 1
          %s436 = smul.addr %s435, 8
          %s437 = smul.addr %s436, 4
          %s438 = scalar_lea.vmem %s0, %s437
        $region76: #{lenet5_forward.1} parent=71 // pred_fallthru
          _
      $region72: #{lenet5_forward.1} parent=5 // pred_fallthru
        _
      %p439 = scmp.le.s32.totalorder 1, %s24
      %p440 = scmp.lt.s32.totalorder %s24, 3
      %p441 = pnand %p439, %p440
      %p442 = pneg %p441
      // Predicated region
      $region77: #{lenet5_forward.1} parent=5 // pred_check
        _
      $region78: #{lenet5_forward.1} parent=5 // pred_check_branch
        %444 = sbr.rel (%p441) target = $region80
      $region79: #{lenet5_forward.1} parent=5 // pred_region
        %s445 = ssub.s32 %s24, 1
        %p446 = scmp.lt.s32.totalorder %s29, 1
        %s447 = scalar_select %p446, %s29, 1
        %s448 = smul.addr %s447, 8
        %s449 = smul.addr %s448, 4
        %s450 = scalar_lea.vmem %s0, %s449
        %p451 = pneg %p50
        %p452 = pneg %p47
        %p453 = pneg %p71
        %p454 = pneg %p68
        %p455 = pneg %p92
        %p456 = pneg %p89
        %p457 = pneg %p113
        %p458 = pneg %p110
        %p459 = pneg %p134
        %p460 = pneg %p131
        %p461 = pneg %p155
        %p462 = pneg %p152
        %p463 = pneg %p176
        %p464 = pneg %p173
        %p465 = pneg %p197
        %p466 = pneg %p194
        %p467 = pneg %p218
        %p468 = pneg %p215
        %p469 = pneg %p239
        %p470 = pneg %p236
        %p471 = pneg %p260
        %p472 = pneg %p257
        %p473 = pneg %p281
        %p474 = pneg %p278
        %p475 = pneg %p302
        %p476 = pneg %p299
        %p477 = pneg %p323
        %p478 = pneg %p320
        %p479 = pneg %p344
        %p480 = pneg %p341
        %p481 = pneg %p370
        %p482 = pneg %p367
        %s483 = sand.u32 %s357, 1
        %s484 = scalar_lea.sflag [#allocation4], %s483
        %s485 = sand.u32 %s357, 1
        %s486 = scalar_lea.vmem [#allocation3], %s485
        %p487 = scmp.lt.s32.totalorder %s29, 1
        %s488 = scalar_select %p487, %s29, 1
        %s489 = smul.addr %s488, 8
        %s490 = smul.addr %s489, 4
        %s491 = scalar_lea.vmem %s0, %s490
        %v493 = vld [vmem:[%s491] sm:$0xff]
        %v494 = vld [vmem:[%s491 + $0x8] sm:$0xff]
        %v495 = vld [vmem:[%s491 + $0x10] sm:$0xff]
        %v496 = vld [vmem:[%s491 + $0x18] sm:$0x33]
        %v497 = vld [vmem:[%s1] sm:$0xff]
        %v498 = vld [vmem:[%s1 + $0x8] sm:$0xff]
        %v499 = vld [vmem:[%s1 + $0x10] sm:$0xff]
        %v500 = vld [vmem:[%s1 + $0x18] sm:$0xff]
        %v501 = vld [vmem:[%s1 + $0x20] sm:$0xff]
        %v502 = vld [vmem:[%s1 + $0x28] sm:$0xff]
        %v503 = vld [vmem:[%s1 + $0x30] sm:$0xff]
        %v504 = vld [vmem:[%s1 + $0x38] sm:$0xff]
        %v505 = vld [vmem:[%s1 + $0x40] sm:$0xff]
        %v506 = vld [vmem:[%s1 + $0x48] sm:$0xff]
        %v507 = vld [vmem:[%s1 + $0x50] sm:$0xff]
        %v508 = vld [vmem:[%s1 + $0x58] sm:$0xff]
        %v509 = vld [vmem:[%s1 + $0x60] sm:$0xff]
        %v510 = vld [vmem:[%s1 + $0x68] sm:$0xff]
        %v511 = vld [vmem:[%s1 + $0x70] sm:$0xff]
        %v512 = vld [vmem:[%s1 + $0x78] sm:$0xff]
        %v513 = vld [vmem:[%s1 + $0x80] sm:$0xff]
        %v514 = vld [vmem:[%s1 + $0x88] sm:$0xff]
        %v515 = vld [vmem:[%s1 + $0x90] sm:$0xff]
        %v516 = vld [vmem:[%s1 + $0x98] sm:$0xff]
        %v517 = vld [vmem:[%s2] sm:$0x3]
        %v519 = vlaneseq
        %v520 = vshrl.u32 %v519, 7
        %v521 = vsub.s32 0, %v520
        %v522 = vrot.slane %v517, %v521
        %v523 = vlaneseq
        %v524 = vshrl.u32 %v523, 7
        %v525 = vsub.s32 1, %v524
        %v526 = vrot.slane %v517, %v525
        %v533 = vunpack.c.l.b16 %v493
        %v534 = vunpack.c.h.b16 %v493
        %v535 = vunpack.c.l.b16 %v494
        %v536 = vunpack.c.h.b16 %v494
        %v537 = vunpack.c.l.b16 %v495
        %v538 = vunpack.c.h.b16 %v495
        %v539 = vunpack.c.l.b16 %v496
        %v540 = vunpack.c.h.b16 %v496
        %v541 = vpack.c.b16 %v535, %v533
        %v542 = vpack.c.b16 %v536, %v534
        %v543 = vpack.c.b16 %v539, %v537
        %v544 = vpack.c.b16 %v540, %v538
        %v567 = vunpack.c.l.b16 %v497
        %v568 = vunpack.c.h.b16 %v497
        %v569 = vunpack.c.l.b16 %v498
        %v570 = vunpack.c.h.b16 %v498
        %v571 = vunpack.c.l.b16 %v499
        %v572 = vunpack.c.h.b16 %v499
        %v573 = vunpack.c.l.b16 %v500
        %v574 = vunpack.c.h.b16 %v500
        %v575 = vunpack.c.l.b16 %v501
        %v576 = vunpack.c.h.b16 %v501
        %v577 = vunpack.c.l.b16 %v502
        %v578 = vunpack.c.h.b16 %v502
        %v579 = vunpack.c.l.b16 %v503
        %v580 = vunpack.c.h.b16 %v503
        %v581 = vunpack.c.l.b16 %v504
        %v582 = vunpack.c.h.b16 %v504
        %v583 = vunpack.c.l.b16 %v505
        %v584 = vunpack.c.h.b16 %v505
        %v585 = vunpack.c.l.b16 %v506
        %v586 = vunpack.c.h.b16 %v506
        %v587 = vunpack.c.l.b16 %v507
        %v588 = vunpack.c.h.b16 %v507
        %v589 = vunpack.c.l.b16 %v508
        %v590 = vunpack.c.h.b16 %v508
        %v591 = vunpack.c.l.b16 %v509
        %v592 = vunpack.c.h.b16 %v509
        %v593 = vunpack.c.l.b16 %v510
        %v594 = vunpack.c.h.b16 %v510
        %v595 = vunpack.c.l.b16 %v511
        %v596 = vunpack.c.h.b16 %v511
        %v597 = vunpack.c.l.b16 %v512
        %v598 = vunpack.c.h.b16 %v512
        %v599 = vunpack.c.l.b16 %v513
        %v600 = vunpack.c.h.b16 %v513
        %v601 = vunpack.c.l.b16 %v514
        %v602 = vunpack.c.h.b16 %v514
        %v603 = vunpack.c.l.b16 %v515
        %v604 = vunpack.c.h.b16 %v515
        %v605 = vunpack.c.l.b16 %v516
        %v606 = vunpack.c.h.b16 %v516
        %v607 = vpack.c.b16 %v569, %v567
        %v608 = vpack.c.b16 %v570, %v568
        %v609 = vpack.c.b16 %v573, %v571
        %v610 = vpack.c.b16 %v574, %v572
        %v611 = vpack.c.b16 %v577, %v575
        %v612 = vpack.c.b16 %v578, %v576
        %v613 = vpack.c.b16 %v581, %v579
        %v614 = vpack.c.b16 %v582, %v580
        %v615 = vpack.c.b16 %v585, %v583
        %v616 = vpack.c.b16 %v586, %v584
        %v617 = vpack.c.b16 %v589, %v587
        %v618 = vpack.c.b16 %v590, %v588
        %v619 = vpack.c.b16 %v593, %v591
        %v620 = vpack.c.b16 %v594, %v592
        %v621 = vpack.c.b16 %v597, %v595
        %v622 = vpack.c.b16 %v598, %v596
        %v623 = vpack.c.b16 %v601, %v599
        %v624 = vpack.c.b16 %v602, %v600
        %v625 = vpack.c.b16 %v605, %v603
        %v626 = vpack.c.b16 %v606, %v604
        %vm647 = vcmask 261120
        %v649 = vsel %vm647, %v542, 0
        %v652 = vsel %vm647, %v544, 0
        %654 = vmatprep.subr.bf16.mxu0 %v608
        %655 = vmatpush1.bf16.msra.mxu0 %v607
        %656 = vmatprep.subr.bf16.mxu0 %v610
        %657 = vmatpush1.bf16.msra.mxu0 %v609
        %658 = vmatprep.subr.bf16.mxu0 %v612
        %659 = vmatpush1.bf16.msra.mxu0 %v611
        %660 = vmatprep.subr.bf16.mxu0 %v614
        %661 = vmatpush1.bf16.msra.mxu0 %v613
        %662 = vmatprep.subr.bf16.mxu0 %v616
        %663 = vmatpush1.bf16.msra.mxu0 %v615
        %664 = vmatprep.subr.bf16.mxu0 %v618
        %665 = vmatpush1.bf16.msra.mxu0 %v617
        %666 = vmatprep.subr.bf16.mxu0 %v620
        %667 = vmatpush1.bf16.msra.mxu0 %v619
        %668 = vmatprep.subr.bf16.mxu0 %v622
        %669 = vmatpush1.bf16.msra.mxu0 %v621
        %670 = vmatprep.subr.bf16.mxu0 %v624
        %671 = vmatpush1.bf16.msra.mxu0 %v623
        %672 = vmatprep.subr.bf16.mxu0 %v626
        %673 = vmatpush1.bf16.msra.mxu0 %v625
        %674 = vmatprep.subr.bf16.mxu0 0
        %675 = vmatpush1.bf16.msra.mxu0 0
        %676 = vmatprep.subr.bf16.mxu0 0
        %677 = vmatpush1.bf16.msra.mxu0 0
        %678 = vmatprep.subr.bf16.mxu0 0
        %679 = vmatpush1.bf16.msra.mxu0 0
        %680 = vmatprep.subr.bf16.mxu0 0
        %681 = vmatpush1.bf16.msra.mxu0 0
        %682 = vmatprep.subr.bf16.mxu0 0
        %683 = vmatpush1.bf16.msra.mxu0 0
        %684 = vmatprep.subr.bf16.mxu0 0
        %685 = vmatpush1.bf16.msra.mxu0 0
        %686 = vmatprep.mubr.bf16.mxu0 %v649
        %687 = vmatmul.mubr.bf16.gmra.mrb[0].mxu0 %v541
        %v688 = vpop.f32.mrb[0].mxu0
        %v689 = vadd.f32 %v522, %v688
        %v690 = vpop.f32.mrb[0].mxu0
        %v691 = vadd.f32 %v526, %v690
        %v692 = vpop.f32.mrb[0].mxu0
        %v693 = vadd.f32 %v522, %v692
        %v694 = vpop.f32.mrb[0].mxu0
        %v695 = vadd.f32 %v526, %v694
        %696 = vmatprep.mubr.bf16.mxu0 %v652
        %697 = vmatmul.mubr.bf16.gmra.mrb[0].mxu0 %v543
        %v698 = vpop.f32.mrb[0].mxu0
        %v699 = vadd.f32 %v522, %v698
        %v700 = vpop.f32.mrb[0].mxu0
        %v701 = vadd.f32 %v526, %v700
        %v702 = vpop.f32.mrb[0].mxu0
        %v703 = vadd.f32 %v522, %v702
        %v704 = vpop.f32.mrb[0].mxu0
        %v705 = vadd.f32 %v526, %v704
        %706 = vdwg.mxu0
        %v707 = vmax.f32 %v689, 0.0
        %v708 = vmax.f32 %v691, 0.0
        %v709 = vmax.f32 %v693, 0.0
        %v710 = vmax.f32 %v695, 0.0
        %v711 = vmax.f32 %v699, 0.0
        %v712 = vmax.f32 %v701, 0.0
        %v713 = vmax.f32 %v703, 0.0
        %v714 = vmax.f32 %v705, 0.0
        %723 = vrot.lane.b32.xlu0 %v707, 127
        %v724 = vpop.permute.xlu0 %723
        %725 = vrot.lane.b32.xlu0 %v708, 127
        %v726 = vpop.permute.xlu0 %725
        %727 = vrot.lane.b32.xlu0 %v709, 127
        %v728 = vpop.permute.xlu0 %727
        %729 = vrot.lane.b32.xlu0 %v710, 127
        %v730 = vpop.permute.xlu0 %729
        %731 = vrot.lane.b32.xlu0 %v711, 127
        %v732 = vpop.permute.xlu0 %731
        %733 = vrot.lane.b32.xlu0 %v712, 127
        %v734 = vpop.permute.xlu0 %733
        %735 = vrot.lane.b32.xlu0 %v713, 127
        %v736 = vpop.permute.xlu0 %735
        %737 = vrot.lane.b32.xlu0 %v714, 127
        %v738 = vpop.permute.xlu0 %737
        %vm739 = vcmask 1039360
        %v740 = vsel %vm739, %v724, %v726
        %v741 = vsel %vm739, %v728, %v730
        %v742 = vsel %vm739, %v732, %v734
        %v743 = vsel %vm739, %v736, %v738
        %v752 = vmax.f32 %v707, %v740
        %v753 = vmax.f32 %v708, %v726
        %v754 = vmax.f32 %v709, %v741
        %v755 = vmax.f32 %v710, %v730
        %v756 = vmax.f32 %v711, %v742
        %v757 = vmax.f32 %v712, %v734
        %v758 = vmax.f32 %v713, %v743
        %v759 = vmax.f32 %v714, %v738
        %v760 = vpack.c.bf16 %v754, %v752
        %v761 = vpack.c.bf16 %v755, %v753
        %v762 = vpack.c.bf16 %v758, %v756
        %v763 = vpack.c.bf16 %v759, %v757
        %v764 = vld [vmem:[%s3] sm:$0xf]
        %v765 = vld [vmem:[%s3 + $0x4] sm:$0x7]
        %v768 = vunpack.c.l.b16 %v764
        %v769 = vunpack.c.l.b16 %v765
        %v770 = vpack.c.b16 %v769, %v768
        %vm771 = vcmask 228352
        %v773 = vsel %vm771, %v770, 0
        %vm775 = vcmask 1045504
        %v777 = vsel %vm775, %v762, 0
        %v780 = vsel %vm775, %v763, 0
        %782 = vmatprep.subr.bf16.mxu0 %v761
        %783 = vmatpush1.bf16.msra.mxu0 %v760
        %784 = vmatprep.subr.bf16.mxu0 %v780
        %785 = vmatpush1.bf16.msra.mxu0 %v777
        %786 = vmatprep.subr.bf16.mxu0 0
        %787 = vmatpush1.bf16.msra.mxu0 0
        %788 = vmatprep.subr.bf16.mxu0 0
        %789 = vmatpush1.bf16.msra.mxu0 0
        %790 = vmatprep.subr.bf16.mxu0 0
        %791 = vmatpush1.bf16.msra.mxu0 0
        %792 = vmatprep.subr.bf16.mxu0 0
        %793 = vmatpush1.bf16.msra.mxu0 0
        %794 = vmatprep.subr.bf16.mxu0 0
        %795 = vmatpush1.bf16.msra.mxu0 0
        %796 = vmatprep.subr.bf16.mxu0 0
        %797 = vmatpush1.bf16.msra.mxu0 0
        %798 = vmatprep.subr.bf16.mxu0 0
        %799 = vmatpush1.bf16.msra.mxu0 0
        %800 = vmatprep.subr.bf16.mxu0 0
        %801 = vmatpush1.bf16.msra.mxu0 0
        %802 = vmatprep.subr.bf16.mxu0 0
        %803 = vmatpush1.bf16.msra.mxu0 0
        %804 = vmatprep.subr.bf16.mxu0 0
        %805 = vmatpush1.bf16.msra.mxu0 0
        %806 = vmatprep.subr.bf16.mxu0 0
        %807 = vmatpush1.bf16.msra.mxu0 0
        %808 = vmatprep.subr.bf16.mxu0 0
        %809 = vmatpush1.bf16.msra.mxu0 0
        %810 = vmatprep.subr.bf16.mxu0 0
        %811 = vmatpush1.bf16.msra.mxu0 0
        %812 = vmatprep.subr.bf16.mxu0 0
        %813 = vmatpush1.bf16.msra.mxu0 0
        %814 = vmatprep.mubr.bf16.mxu0 0
        %815 = vmatmul.mubr.bf16.gmra.mrb[0].mxu0 %v773
        %v816 = vpop.f32.mrb[0].mxu0
        %v817 = vadd.f32 0.0, %v816
        %v818 = vpop.f32.mrb[0].mxu0
        %v819 = vadd.f32 0.0, %v818
        %v820 = vpop.f32.mrb[0].mxu0
        %v821 = vadd.f32 0.0, %v820
        %v822 = vpop.f32.mrb[0].mxu0
        %v823 = vadd.f32 0.0, %v822
        %824 = vdwg.mxu0
        %v825 = vld [vmem:[%s4] sm:$0xf]
        %v826 = vld [vmem:[%s4 + $0x4] sm:$0x7]
        %v829 = vunpack.c.l.b16 %v825
        %v830 = vunpack.c.l.b16 %v826
        %v831 = vpack.c.b16 %v830, %v829
        %v833 = vsel %vm771, %v831, 0
        %835 = vmatprep.subr.bf16.mxu0 %v761
        %836 = vmatpush1.bf16.msra.mxu0 %v760
        %837 = vmatprep.subr.bf16.mxu0 %v780
        %838 = vmatpush1.bf16.msra.mxu0 %v777
        %839 = vmatprep.subr.bf16.mxu0 0
        %840 = vmatpush1.bf16.msra.mxu0 0
        %841 = vmatprep.subr.bf16.mxu0 0
        %842 = vmatpush1.bf16.msra.mxu0 0
        %843 = vmatprep.subr.bf16.mxu0 0
        %844 = vmatpush1.bf16.msra.mxu0 0
        %845 = vmatprep.subr.bf16.mxu0 0
        %846 = vmatpush1.bf16.msra.mxu0 0
        %847 = vmatprep.subr.bf16.mxu0 0
        %848 = vmatpush1.bf16.msra.mxu0 0
        %849 = vmatprep.subr.bf16.mxu0 0
        %850 = vmatpush1.bf16.msra.mxu0 0
        %851 = vmatprep.subr.bf16.mxu0 0
        %852 = vmatpush1.bf16.msra.mxu0 0
        %853 = vmatprep.subr.bf16.mxu0 0
        %854 = vmatpush1.bf16.msra.mxu0 0
        %855 = vmatprep.subr.bf16.mxu0 0
        %856 = vmatpush1.bf16.msra.mxu0 0
        %857 = vmatprep.subr.bf16.mxu0 0
        %858 = vmatpush1.bf16.msra.mxu0 0
        %859 = vmatprep.subr.bf16.mxu0 0
        %860 = vmatpush1.bf16.msra.mxu0 0
        %861 = vmatprep.subr.bf16.mxu0 0
        %862 = vmatpush1.bf16.msra.mxu0 0
        %863 = vmatprep.subr.bf16.mxu0 0
        %864 = vmatpush1.bf16.msra.mxu0 0
        %865 = vmatprep.subr.bf16.mxu0 0
        %866 = vmatpush1.bf16.msra.mxu0 0
        %867 = vmatprep.mubr.bf16.mxu0 0
        %868 = vmatmul.mubr.bf16.gmra.mrb[0].mxu0 %v833
        %v869 = vpop.f32.mrb[0].mxu0
        %v870 = vadd.f32 0.0, %v869
        %v871 = vpop.f32.mrb[0].mxu0
        %v872 = vadd.f32 0.0, %v871
        %v873 = vpop.f32.mrb[0].mxu0
        %v874 = vadd.f32 0.0, %v873
        %v875 = vpop.f32.mrb[0].mxu0
        %v876 = vadd.f32 0.0, %v875
        %877 = vdwg.mxu0
        %v878 = vmax.f32 %v817, %v870
        %v879 = vmax.f32 %v819, %v872
        %v880 = vmax.f32 %v821, %v874
        %v881 = vmax.f32 %v823, %v876
        %v882 = vpack.c.bf16 %v880, %v878
        %v883 = vpack.c.bf16 %v881, %v879
        %v884 = vld [vmem:[%s5] sm:$0xff]
        %v885 = vld [vmem:[%s5 + $0x8] sm:$0xff]
        %v886 = vld [vmem:[%s5 + $0x10] sm:$0xff]
        %v887 = vld [vmem:[%s5 + $0x18] sm:$0xff]
        %v888 = vld [vmem:[%s5 + $0x20] sm:$0xff]
        %v889 = vld [vmem:[%s5 + $0x28] sm:$0xff]
        %v890 = vld [vmem:[%s5 + $0x30] sm:$0xff]
        %v891 = vld [vmem:[%s5 + $0x38] sm:$0xff]
        %v892 = vld [vmem:[%s5 + $0x40] sm:$0xff]
        %v893 = vld [vmem:[%s5 + $0x48] sm:$0xff]
        %v894 = vld [vmem:[%s5 + $0x50] sm:$0xff]
        %v895 = vld [vmem:[%s5 + $0x58] sm:$0xff]
        %v896 = vld [vmem:[%s5 + $0x60] sm:$0xff]
        %v897 = vld [vmem:[%s5 + $0x68] sm:$0xff]
        %v898 = vld [vmem:[%s5 + $0x70] sm:$0xff]
        %v899 = vld [vmem:[%s5 + $0x78] sm:$0xff]
        %v900 = vld [vmem:[%s5 + $0x80] sm:$0xff]
        %v901 = vld [vmem:[%s5 + $0x88] sm:$0xff]
        %v902 = vld [vmem:[%s5 + $0x90] sm:$0xff]
        %v903 = vld [vmem:[%s5 + $0x98] sm:$0xff]
        %v904 = vld [vmem:[%s5 + $0xa0] sm:$0xff]
        %s905 = scalar_lea.vmem %s5, 168
        %v906 = vld [vmem:[%s905] sm:$0xff]
        %v907 = vld [vmem:[%s905 + $0x8] sm:$0xff]
        %v908 = vld [vmem:[%s905 + $0x10] sm:$0xff]
        %v909 = vld [vmem:[%s905 + $0x18] sm:$0xff]
        %v910 = vld [vmem:[%s905 + $0x20] sm:$0xff]
        %v911 = vld [vmem:[%s905 + $0x28] sm:$0xff]
        %v912 = vld [vmem:[%s905 + $0x30] sm:$0xff]
        %v913 = vld [vmem:[%s905 + $0x38] sm:$0xff]
        %v914 = vld [vmem:[%s905 + $0x40] sm:$0xff]
        %v915 = vld [vmem:[%s905 + $0x48] sm:$0xff]
        %v916 = vld [vmem:[%s905 + $0x50] sm:$0xff]
        %v917 = vld [vmem:[%s905 + $0x58] sm:$0xff]
        %v918 = vld [vmem:[%s905 + $0x60] sm:$0xff]
        %v919 = vld [vmem:[%s905 + $0x68] sm:$0xff]
        %v920 = vld [vmem:[%s905 + $0x70] sm:$0xff]
        %v921 = vld [vmem:[%s905 + $0x78] sm:$0xff]
        %v922 = vld [vmem:[%s905 + $0x80] sm:$0xff]
        %v923 = vld [vmem:[%s905 + $0x88] sm:$0xff]
        %v924 = vld [vmem:[%s905 + $0x90] sm:$0xff]
        %v925 = vld [vmem:[%s905 + $0x98] sm:$0xff]
        %v926 = vld [vmem:[%s905 + $0xa0] sm:$0xff]
        %v928 = vshrl.u32 %v882, 16
        %v930 = vshll.u32 %v882, 16
        %v932 = vrot.slane %v930, 1
        %v933 = vor.u32 %v928, %v932
        %v935 = vshrl.u32 %v883, 16
        %v937 = vshll.u32 %v883, 16
        %v939 = vrot.slane %v937, 1
        %v940 = vor.u32 %v935, %v939
        %v963 = vunpack.c.l.b16 %v906
        %v964 = vunpack.c.h.b16 %v906
        %v965 = vunpack.c.l.b16 %v907
        %v966 = vunpack.c.h.b16 %v907
        %v967 = vunpack.c.l.b16 %v908
        %v968 = vunpack.c.h.b16 %v908
        %v969 = vunpack.c.l.b16 %v909
        %v970 = vunpack.c.h.b16 %v909
        %v971 = vunpack.c.l.b16 %v910
        %v972 = vunpack.c.h.b16 %v910
        %v973 = vunpack.c.l.b16 %v911
        %v974 = vunpack.c.h.b16 %v911
        %v975 = vunpack.c.l.b16 %v912
        %v976 = vunpack.c.h.b16 %v912
        %v977 = vunpack.c.l.b16 %v913
        %v978 = vunpack.c.h.b16 %v913
        %v979 = vunpack.c.l.b16 %v914
        %v980 = vunpack.c.h.b16 %v914
        %v981 = vunpack.c.l.b16 %v915
        %v982 = vunpack.c.h.b16 %v915
        %v983 = vunpack.c.l.b16 %v916
        %v984 = vunpack.c.h.b16 %v916
        %v985 = vunpack.c.l.b16 %v917
        %v986 = vunpack.c.h.b16 %v917
        %v987 = vunpack.c.l.b16 %v918
        %v988 = vunpack.c.h.b16 %v918
        %v989 = vunpack.c.l.b16 %v919
        %v990 = vunpack.c.h.b16 %v919
        %v991 = vunpack.c.l.b16 %v920
        %v992 = vunpack.c.h.b16 %v920
        %v993 = vunpack.c.l.b16 %v921
        %v994 = vunpack.c.h.b16 %v921
        %v995 = vunpack.c.l.b16 %v922
        %v996 = vunpack.c.h.b16 %v922
        %v997 = vunpack.c.l.b16 %v923
        %v998 = vunpack.c.h.b16 %v923
        %v999 = vunpack.c.l.b16 %v924
        %v1000 = vunpack.c.h.b16 %v924
        %v1001 = vunpack.c.l.b16 %v925
        %v1002 = vunpack.c.h.b16 %v925
        %v1003 = vunpack.c.l.b16 %v926
        %v1004 = vunpack.c.h.b16 %v926
        %v1005 = vpack.c.b16 %v965, %v963
        %v1006 = vpack.c.b16 %v966, %v964
        %v1007 = vpack.c.b16 %v969, %v967
        %v1008 = vpack.c.b16 %v970, %v968
        %v1009 = vpack.c.b16 %v973, %v971
        %v1010 = vpack.c.b16 %v974, %v972
        %v1011 = vpack.c.b16 %v977, %v975
        %v1012 = vpack.c.b16 %v978, %v976
        %v1013 = vpack.c.b16 %v981, %v979
        %v1014 = vpack.c.b16 %v982, %v980
        %v1015 = vpack.c.b16 %v985, %v983
        %v1016 = vpack.c.b16 %v986, %v984
        %v1017 = vpack.c.b16 %v989, %v987
        %v1018 = vpack.c.b16 %v990, %v988
        %v1019 = vpack.c.b16 %v993, %v991
        %v1020 = vpack.c.b16 %v994, %v992
        %v1021 = vpack.c.b16 %v997, %v995
        %v1022 = vpack.c.b16 %v998, %v996
        %v1023 = vpack.c.b16 %v1001, %v999
        %v1024 = vpack.c.b16 %v1002, %v1000
        %v1025 = vpack.c.b16 %v1003, %v1003
        %v1026 = vpack.c.b16 %v1004, %v1004
        %vm1047 = vcmask 318464
        %v1049 = vsel %vm1047, %v940, 0
        %vm1051 = vcmask 1042432
        %vm1052 = vcmask 1043456
        %v1053 = vsel %vm1051, 4294967295, 65535
        %v1054 = vsel %vm1052, %v1053, 0
        %v1056 = vand.u32 %v1025, %v1054
        %v1059 = vand.u32 %v1026, %v1054
        %1061 = vmatprep.subr.bf16.mxu0 %v1006
        %1062 = vmatpush1.bf16.msra.mxu0 %v1005
        %1063 = vmatprep.subr.bf16.mxu0 %v1008
        %1064 = vmatpush1.bf16.msra.mxu0 %v1007
        %1065 = vmatprep.subr.bf16.mxu0 %v1010
        %1066 = vmatpush1.bf16.msra.mxu0 %v1009
        %1067 = vmatprep.subr.bf16.mxu0 %v1012
        %1068 = vmatpush1.bf16.msra.mxu0 %v1011
        %1069 = vmatprep.subr.bf16.mxu0 %v1014
        %1070 = vmatpush1.bf16.msra.mxu0 %v1013
        %1071 = vmatprep.subr.bf16.mxu0 %v1016
        %1072 = vmatpush1.bf16.msra.mxu0 %v1015
        %1073 = vmatprep.subr.bf16.mxu0 %v1018
        %1074 = vmatpush1.bf16.msra.mxu0 %v1017
        %1075 = vmatprep.subr.bf16.mxu0 %v1020
        %1076 = vmatpush1.bf16.msra.mxu0 %v1019
        %1077 = vmatprep.subr.bf16.mxu0 %v1022
        %1078 = vmatpush1.bf16.msra.mxu0 %v1021
        %1079 = vmatprep.subr.bf16.mxu0 %v1024
        %1080 = vmatpush1.bf16.msra.mxu0 %v1023
        %1081 = vmatprep.subr.bf16.mxu0 %v1059
        %1082 = vmatpush1.bf16.msra.mxu0 %v1056
        %1083 = vmatprep.subr.bf16.mxu0 0
        %1084 = vmatpush1.bf16.msra.mxu0 0
        %1085 = vmatprep.subr.bf16.mxu0 0
        %1086 = vmatpush1.bf16.msra.mxu0 0
        %1087 = vmatprep.subr.bf16.mxu0 0
        %1088 = vmatpush1.bf16.msra.mxu0 0
        %1089 = vmatprep.subr.bf16.mxu0 0
        %1090 = vmatpush1.bf16.msra.mxu0 0
        %1091 = vmatprep.subr.bf16.mxu0 0
        %1092 = vmatpush1.bf16.msra.mxu0 0
        %1093 = vmatprep.mubr.bf16.mxu0 %v1049
        %1094 = vmatmul.mubr.bf16.gmra.mrb[0].mxu0 %v933
        %v1095 = vpop.f32.mrb[0].mxu0
        %v1096 = vadd.f32 0.0, %v1095
        %v1097 = vpop.f32.mrb[0].mxu0
        %v1098 = vadd.f32 0.0, %v1097
        %v1099 = vpop.f32.mrb[0].mxu0
        %v1100 = vadd.f32 0.0, %v1099
        %v1101 = vpop.f32.mrb[0].mxu0
        %v1102 = vadd.f32 0.0, %v1101
        %1103 = vdwg.mxu0
        %v1125 = vunpack.c.l.b16 %v884
        %v1126 = vunpack.c.h.b16 %v884
        %v1127 = vunpack.c.l.b16 %v885
        %v1128 = vunpack.c.h.b16 %v885
        %v1129 = vunpack.c.l.b16 %v886
        %v1130 = vunpack.c.h.b16 %v886
        %v1131 = vunpack.c.l.b16 %v887
        %v1132 = vunpack.c.h.b16 %v887
        %v1133 = vunpack.c.l.b16 %v888
        %v1134 = vunpack.c.h.b16 %v888
        %v1135 = vunpack.c.l.b16 %v889
        %v1136 = vunpack.c.h.b16 %v889
        %v1137 = vunpack.c.l.b16 %v890
        %v1138 = vunpack.c.h.b16 %v890
        %v1139 = vunpack.c.l.b16 %v891
        %v1140 = vunpack.c.h.b16 %v891
        %v1141 = vunpack.c.l.b16 %v892
        %v1142 = vunpack.c.h.b16 %v892
        %v1143 = vunpack.c.l.b16 %v893
        %v1144 = vunpack.c.h.b16 %v893
        %v1145 = vunpack.c.l.b16 %v894
        %v1146 = vunpack.c.h.b16 %v894
        %v1147 = vunpack.c.l.b16 %v895
        %v1148 = vunpack.c.h.b16 %v895
        %v1149 = vunpack.c.l.b16 %v896
        %v1150 = vunpack.c.h.b16 %v896
        %v1151 = vunpack.c.l.b16 %v897
        %v1152 = vunpack.c.h.b16 %v897
        %v1153 = vunpack.c.l.b16 %v898
        %v1154 = vunpack.c.h.b16 %v898
        %v1155 = vunpack.c.l.b16 %v899
        %v1156 = vunpack.c.h.b16 %v899
        %v1157 = vunpack.c.l.b16 %v900
        %v1158 = vunpack.c.h.b16 %v900
        %v1159 = vunpack.c.l.b16 %v901
        %v1160 = vunpack.c.h.b16 %v901
        %v1161 = vunpack.c.l.b16 %v902
        %v1162 = vunpack.c.h.b16 %v902
        %v1163 = vunpack.c.l.b16 %v903
        %v1164 = vunpack.c.h.b16 %v903
        %v1165 = vunpack.c.l.b16 %v904
        %v1166 = vunpack.c.h.b16 %v904
        %v1167 = vpack.c.b16 %v1127, %v1125
        %v1168 = vpack.c.b16 %v1128, %v1126
        %v1169 = vpack.c.b16 %v1131, %v1129
        %v1170 = vpack.c.b16 %v1132, %v1130
        %v1171 = vpack.c.b16 %v1135, %v1133
        %v1172 = vpack.c.b16 %v1136, %v1134
        %v1173 = vpack.c.b16 %v1139, %v1137
        %v1174 = vpack.c.b16 %v1140, %v1138
        %v1175 = vpack.c.b16 %v1143, %v1141
        %v1176 = vpack.c.b16 %v1144, %v1142
        %v1177 = vpack.c.b16 %v1147, %v1145
        %v1178 = vpack.c.b16 %v1148, %v1146
        %v1179 = vpack.c.b16 %v1151, %v1149
        %v1180 = vpack.c.b16 %v1152, %v1150
        %v1181 = vpack.c.b16 %v1155, %v1153
        %v1182 = vpack.c.b16 %v1156, %v1154
        %v1183 = vpack.c.b16 %v1159, %v1157
        %v1184 = vpack.c.b16 %v1160, %v1158
        %v1185 = vpack.c.b16 %v1163, %v1161
        %v1186 = vpack.c.b16 %v1164, %v1162
        %v1187 = vpack.c.b16 %v1165, %v1165
        %v1188 = vpack.c.b16 %v1166, %v1166
        %v1209 = vsel %vm1047, %v883, 0
        %v1212 = vand.u32 %v1187, %v1054
        %v1215 = vand.u32 %v1188, %v1054
        %1217 = vmatprep.subr.bf16.mxu0 %v1168
        %1218 = vmatpush1.bf16.msra.mxu0 %v1167
        %1219 = vmatprep.subr.bf16.mxu0 %v1170
        %1220 = vmatpush1.bf16.msra.mxu0 %v1169
        %1221 = vmatprep.subr.bf16.mxu0 %v1172
        %1222 = vmatpush1.bf16.msra.mxu0 %v1171
        %1223 = vmatprep.subr.bf16.mxu0 %v1174
        %1224 = vmatpush1.bf16.msra.mxu0 %v1173
        %1225 = vmatprep.subr.bf16.mxu0 %v1176
        %1226 = vmatpush1.bf16.msra.mxu0 %v1175
        %1227 = vmatprep.subr.bf16.mxu0 %v1178
        %1228 = vmatpush1.bf16.msra.mxu0 %v1177
        %1229 = vmatprep.subr.bf16.mxu0 %v1180
        %1230 = vmatpush1.bf16.msra.mxu0 %v1179
        %1231 = vmatprep.subr.bf16.mxu0 %v1182
        %1232 = vmatpush1.bf16.msra.mxu0 %v1181
        %1233 = vmatprep.subr.bf16.mxu0 %v1184
        %1234 = vmatpush1.bf16.msra.mxu0 %v1183
        %1235 = vmatprep.subr.bf16.mxu0 %v1186
        %1236 = vmatpush1.bf16.msra.mxu0 %v1185
        %1237 = vmatprep.subr.bf16.mxu0 %v1215
        %1238 = vmatpush1.bf16.msra.mxu0 %v1212
        %1239 = vmatprep.subr.bf16.mxu0 0
        %1240 = vmatpush1.bf16.msra.mxu0 0
        %1241 = vmatprep.subr.bf16.mxu0 0
        %1242 = vmatpush1.bf16.msra.mxu0 0
        %1243 = vmatprep.subr.bf16.mxu0 0
        %1244 = vmatpush1.bf16.msra.mxu0 0
        %1245 = vmatprep.subr.bf16.mxu0 0
        %1246 = vmatpush1.bf16.msra.mxu0 0
        %1247 = vmatprep.subr.bf16.mxu0 0
        %1248 = vmatpush1.bf16.msra.mxu0 0
        %1249 = vmatprep.mubr.bf16.mxu0 %v1209
        %1250 = vmatmul.mubr.bf16.gmra.mrb[0].mxu0 %v882
        %v1251 = vpop.f32.mrb[0].mxu0
        %v1252 = vadd.f32 %v1096, %v1251
        %v1253 = vpop.f32.mrb[0].mxu0
        %v1254 = vadd.f32 %v1098, %v1253
        %v1255 = vpop.f32.mrb[0].mxu0
        %v1256 = vadd.f32 %v1100, %v1255
        %v1257 = vpop.f32.mrb[0].mxu0
        %v1258 = vadd.f32 %v1102, %v1257
        %1259 = vdwg.mxu0
        %s1260 = scalar_lea.vmem %s5, 336
        %v1261 = vld [vmem:[%s1260] sm:$0xff]
        %v1262 = vld [vmem:[%s1260 + $0x8] sm:$0xff]
        %v1263 = vld [vmem:[%s1260 + $0x10] sm:$0xff]
        %v1264 = vld [vmem:[%s1260 + $0x18] sm:$0xff]
        %v1265 = vld [vmem:[%s1260 + $0x20] sm:$0xff]
        %v1266 = vld [vmem:[%s1260 + $0x28] sm:$0xff]
        %v1267 = vld [vmem:[%s1260 + $0x30] sm:$0xff]
        %v1268 = vld [vmem:[%s1260 + $0x38] sm:$0xff]
        %v1269 = vld [vmem:[%s1260 + $0x40] sm:$0xff]
        %v1270 = vld [vmem:[%s1260 + $0x48] sm:$0xff]
        %v1271 = vld [vmem:[%s1260 + $0x50] sm:$0xff]
        %v1272 = vld [vmem:[%s1260 + $0x58] sm:$0xff]
        %v1273 = vld [vmem:[%s1260 + $0x60] sm:$0xff]
        %v1274 = vld [vmem:[%s1260 + $0x68] sm:$0xff]
        %v1275 = vld [vmem:[%s1260 + $0x70] sm:$0xff]
        %v1276 = vld [vmem:[%s1260 + $0x78] sm:$0xff]
        %v1277 = vld [vmem:[%s1260 + $0x80] sm:$0xff]
        %v1278 = vld [vmem:[%s1260 + $0x88] sm:$0xff]
        %v1279 = vld [vmem:[%s1260 + $0x90] sm:$0xff]
        %v1280 = vld [vmem:[%s1260 + $0x98] sm:$0xff]
        %v1281 = vld [vmem:[%s1260 + $0xa0] sm:$0xff]
        %v1284 = vrot.slane %v882, 1
        %v1285 = vrot.slane %v883, 1
        %v1308 = vunpack.c.l.b16 %v1261
        %v1309 = vunpack.c.h.b16 %v1261
        %v1310 = vunpack.c.l.b16 %v1262
        %v1311 = vunpack.c.h.b16 %v1262
        %v1312 = vunpack.c.l.b16 %v1263
        %v1313 = vunpack.c.h.b16 %v1263
        %v1314 = vunpack.c.l.b16 %v1264
        %v1315 = vunpack.c.h.b16 %v1264
        %v1316 = vunpack.c.l.b16 %v1265
        %v1317 = vunpack.c.h.b16 %v1265
        %v1318 = vunpack.c.l.b16 %v1266
        %v1319 = vunpack.c.h.b16 %v1266
        %v1320 = vunpack.c.l.b16 %v1267
        %v1321 = vunpack.c.h.b16 %v1267
        %v1322 = vunpack.c.l.b16 %v1268
        %v1323 = vunpack.c.h.b16 %v1268
        %v1324 = vunpack.c.l.b16 %v1269
        %v1325 = vunpack.c.h.b16 %v1269
        %v1326 = vunpack.c.l.b16 %v1270
        %v1327 = vunpack.c.h.b16 %v1270
        %v1328 = vunpack.c.l.b16 %v1271
        %v1329 = vunpack.c.h.b16 %v1271
        %v1330 = vunpack.c.l.b16 %v1272
        %v1331 = vunpack.c.h.b16 %v1272
        %v1332 = vunpack.c.l.b16 %v1273
        %v1333 = vunpack.c.h.b16 %v1273
        %v1334 = vunpack.c.l.b16 %v1274
        %v1335 = vunpack.c.h.b16 %v1274
        %v1336 = vunpack.c.l.b16 %v1275
        %v1337 = vunpack.c.h.b16 %v1275
        %v1338 = vunpack.c.l.b16 %v1276
        %v1339 = vunpack.c.h.b16 %v1276
        %v1340 = vunpack.c.l.b16 %v1277
        %v1341 = vunpack.c.h.b16 %v1277
        %v1342 = vunpack.c.l.b16 %v1278
        %v1343 = vunpack.c.h.b16 %v1278
        %v1344 = vunpack.c.l.b16 %v1279
        %v1345 = vunpack.c.h.b16 %v1279
        %v1346 = vunpack.c.l.b16 %v1280
        %v1347 = vunpack.c.h.b16 %v1280
        %v1348 = vunpack.c.l.b16 %v1281
        %v1349 = vunpack.c.h.b16 %v1281
        %v1350 = vpack.c.b16 %v1310, %v1308
        %v1351 = vpack.c.b16 %v1311, %v1309
        %v1352 = vpack.c.b16 %v1314, %v1312
        %v1353 = vpack.c.b16 %v1315, %v1313
        %v1354 = vpack.c.b16 %v1318, %v1316
        %v1355 = vpack.c.b16 %v1319, %v1317
        %v1356 = vpack.c.b16 %v1322, %v1320
        %v1357 = vpack.c.b16 %v1323, %v1321
        %v1358 = vpack.c.b16 %v1326, %v1324
        %v1359 = vpack.c.b16 %v1327, %v1325
        %v1360 = vpack.c.b16 %v1330, %v1328
        %v1361 = vpack.c.b16 %v1331, %v1329
        %v1362 = vpack.c.b16 %v1334, %v1332
        %v1363 = vpack.c.b16 %v1335, %v1333
        %v1364 = vpack.c.b16 %v1338, %v1336
        %v1365 = vpack.c.b16 %v1339, %v1337
        %v1366 = vpack.c.b16 %v1342, %v1340
        %v1367 = vpack.c.b16 %v1343, %v1341
        %v1368 = vpack.c.b16 %v1346, %v1344
        %v1369 = vpack.c.b16 %v1347, %v1345
        %v1370 = vpack.c.b16 %v1348, %v1348
        %v1371 = vpack.c.b16 %v1349, %v1349
        %v1393 = vsel %vm1047, %v1285, 0
        %v1396 = vand.u32 %v1370, %v1054
        %v1399 = vand.u32 %v1371, %v1054
        %1401 = vmatprep.subr.bf16.mxu0 %v1351
        %1402 = vmatpush1.bf16.msra.mxu0 %v1350
        %1403 = vmatprep.subr.bf16.mxu0 %v1353
        %1404 = vmatpush1.bf16.msra.mxu0 %v1352
        %1405 = vmatprep.subr.bf16.mxu0 %v1355
        %1406 = vmatpush1.bf16.msra.mxu0 %v1354
        %1407 = vmatprep.subr.bf16.mxu0 %v1357
        %1408 = vmatpush1.bf16.msra.mxu0 %v1356
        %1409 = vmatprep.subr.bf16.mxu0 %v1359
        %1410 = vmatpush1.bf16.msra.mxu0 %v1358
        %1411 = vmatprep.subr.bf16.mxu0 %v1361
        %1412 = vmatpush1.bf16.msra.mxu0 %v1360
        %1413 = vmatprep.subr.bf16.mxu0 %v1363
        %1414 = vmatpush1.bf16.msra.mxu0 %v1362
        %1415 = vmatprep.subr.bf16.mxu0 %v1365
        %1416 = vmatpush1.bf16.msra.mxu0 %v1364
        %1417 = vmatprep.subr.bf16.mxu0 %v1367
        %1418 = vmatpush1.bf16.msra.mxu0 %v1366
        %1419 = vmatprep.subr.bf16.mxu0 %v1369
        %1420 = vmatpush1.bf16.msra.mxu0 %v1368
        %1421 = vmatprep.subr.bf16.mxu0 %v1399
        %1422 = vmatpush1.bf16.msra.mxu0 %v1396
        %1423 = vmatprep.subr.bf16.mxu0 0
        %1424 = vmatpush1.bf16.msra.mxu0 0
        %1425 = vmatprep.subr.bf16.mxu0 0
        %1426 = vmatpush1.bf16.msra.mxu0 0
        %1427 = vmatprep.subr.bf16.mxu0 0
        %1428 = vmatpush1.bf16.msra.mxu0 0
        %1429 = vmatprep.subr.bf16.mxu0 0
        %1430 = vmatpush1.bf16.msra.mxu0 0
        %1431 = vmatprep.subr.bf16.mxu0 0
        %1432 = vmatpush1.bf16.msra.mxu0 0
        %1433 = vmatprep.mubr.bf16.mxu0 %v1393
        %1434 = vmatmul.mubr.bf16.gmra.mrb[0].mxu0 %v1284
        %v1435 = vpop.f32.mrb[0].mxu0
        %v1436 = vadd.f32 0.0, %v1435
        %v1437 = vpop.f32.mrb[0].mxu0
        %v1438 = vadd.f32 0.0, %v1437
        %v1439 = vpop.f32.mrb[0].mxu0
        %v1440 = vadd.f32 0.0, %v1439
        %v1441 = vpop.f32.mrb[0].mxu0
        %v1442 = vadd.f32 0.0, %v1441
        %1443 = vdwg.mxu0
        %v1444 = vadd.f32 %v1252, %v1436
        %v1445 = vadd.f32 %v1254, %v1438
        %v1446 = vadd.f32 %v1256, %v1440
        %v1447 = vadd.f32 %v1258, %v1442
        %s1448 = scalar_lea.vmem %s5, 504
        %v1449 = vld [vmem:[%s1448] sm:$0xff]
        %v1450 = vld [vmem:[%s1448 + $0x8] sm:$0xff]
        %v1451 = vld [vmem:[%s1448 + $0x10] sm:$0xff]
        %v1452 = vld [vmem:[%s1448 + $0x18] sm:$0xff]
        %v1453 = vld [vmem:[%s1448 + $0x20] sm:$0xff]
        %v1454 = vld [vmem:[%s1448 + $0x28] sm:$0xff]
        %v1455 = vld [vmem:[%s1448 + $0x30] sm:$0xff]
        %v1456 = vld [vmem:[%s1448 + $0x38] sm:$0xff]
        %v1457 = vld [vmem:[%s1448 + $0x40] sm:$0xff]
        %v1458 = vld [vmem:[%s1448 + $0x48] sm:$0xff]
        %v1459 = vld [vmem:[%s1448 + $0x50] sm:$0xff]
        %v1460 = vld [vmem:[%s1448 + $0x58] sm:$0xff]
        %v1461 = vld [vmem:[%s1448 + $0x60] sm:$0xff]
        %v1462 = vld [vmem:[%s1448 + $0x68] sm:$0xff]
        %v1463 = vld [vmem:[%s1448 + $0x70] sm:$0xff]
        %v1464 = vld [vmem:[%s1448 + $0x78] sm:$0xff]
        %v1465 = vld [vmem:[%s1448 + $0x80] sm:$0xff]
        %v1466 = vld [vmem:[%s1448 + $0x88] sm:$0xff]
        %v1467 = vld [vmem:[%s1448 + $0x90] sm:$0xff]
        %v1468 = vld [vmem:[%s1448 + $0x98] sm:$0xff]
        %v1469 = vld [vmem:[%s1448 + $0xa0] sm:$0xff]
        %v1470 = vrot.slane %v928, 1
        %v1471 = vrot.slane %v930, 2
        %v1472 = vor.u32 %v1470, %v1471
        %v1473 = vrot.slane %v935, 1
        %v1474 = vrot.slane %v937, 2
        %v1475 = vor.u32 %v1473, %v1474
        %v1498 = vunpack.c.l.b16 %v1449
        %v1499 = vunpack.c.h.b16 %v1449
        %v1500 = vunpack.c.l.b16 %v1450
        %v1501 = vunpack.c.h.b16 %v1450
        %v1502 = vunpack.c.l.b16 %v1451
        %v1503 = vunpack.c.h.b16 %v1451
        %v1504 = vunpack.c.l.b16 %v1452
        %v1505 = vunpack.c.h.b16 %v1452
        %v1506 = vunpack.c.l.b16 %v1453
        %v1507 = vunpack.c.h.b16 %v1453
        %v1508 = vunpack.c.l.b16 %v1454
        %v1509 = vunpack.c.h.b16 %v1454
        %v1510 = vunpack.c.l.b16 %v1455
        %v1511 = vunpack.c.h.b16 %v1455
        %v1512 = vunpack.c.l.b16 %v1456
        %v1513 = vunpack.c.h.b16 %v1456
        %v1514 = vunpack.c.l.b16 %v1457
        %v1515 = vunpack.c.h.b16 %v1457
        %v1516 = vunpack.c.l.b16 %v1458
        %v1517 = vunpack.c.h.b16 %v1458
        %v1518 = vunpack.c.l.b16 %v1459
        %v1519 = vunpack.c.h.b16 %v1459
        %v1520 = vunpack.c.l.b16 %v1460
        %v1521 = vunpack.c.h.b16 %v1460
        %v1522 = vunpack.c.l.b16 %v1461
        %v1523 = vunpack.c.h.b16 %v1461
        %v1524 = vunpack.c.l.b16 %v1462
        %v1525 = vunpack.c.h.b16 %v1462
        %v1526 = vunpack.c.l.b16 %v1463
        %v1527 = vunpack.c.h.b16 %v1463
        %v1528 = vunpack.c.l.b16 %v1464
        %v1529 = vunpack.c.h.b16 %v1464
        %v1530 = vunpack.c.l.b16 %v1465
        %v1531 = vunpack.c.h.b16 %v1465
        %v1532 = vunpack.c.l.b16 %v1466
        %v1533 = vunpack.c.h.b16 %v1466
        %v1534 = vunpack.c.l.b16 %v1467
        %v1535 = vunpack.c.h.b16 %v1467
        %v1536 = vunpack.c.l.b16 %v1468
        %v1537 = vunpack.c.h.b16 %v1468
        %v1538 = vunpack.c.l.b16 %v1469
        %v1539 = vunpack.c.h.b16 %v1469
        %v1540 = vpack.c.b16 %v1500, %v1498
        %v1541 = vpack.c.b16 %v1501, %v1499
        %v1542 = vpack.c.b16 %v1504, %v1502
        %v1543 = vpack.c.b16 %v1505, %v1503
        %v1544 = vpack.c.b16 %v1508, %v1506
        %v1545 = vpack.c.b16 %v1509, %v1507
        %v1546 = vpack.c.b16 %v1512, %v1510
        %v1547 = vpack.c.b16 %v1513, %v1511
        %v1548 = vpack.c.b16 %v1516, %v1514
        %v1549 = vpack.c.b16 %v1517, %v1515
        %v1550 = vpack.c.b16 %v1520, %v1518
        %v1551 = vpack.c.b16 %v1521, %v1519
        %v1552 = vpack.c.b16 %v1524, %v1522
        %v1553 = vpack.c.b16 %v1525, %v1523
        %v1554 = vpack.c.b16 %v1528, %v1526
        %v1555 = vpack.c.b16 %v1529, %v1527
        %v1556 = vpack.c.b16 %v1532, %v1530
        %v1557 = vpack.c.b16 %v1533, %v1531
        %v1558 = vpack.c.b16 %v1536, %v1534
        %v1559 = vpack.c.b16 %v1537, %v1535
        %v1560 = vpack.c.b16 %v1538, %v1538
        %v1561 = vpack.c.b16 %v1539, %v1539
        %v1583 = vsel %vm1047, %v1475, 0
        %v1586 = vand.u32 %v1560, %v1054
        %v1589 = vand.u32 %v1561, %v1054
        %1591 = vmatprep.subr.bf16.mxu0 %v1541
        %1592 = vmatpush1.bf16.msra.mxu0 %v1540
        %1593 = vmatprep.subr.bf16.mxu0 %v1543
        %1594 = vmatpush1.bf16.msra.mxu0 %v1542
        %1595 = vmatprep.subr.bf16.mxu0 %v1545
        %1596 = vmatpush1.bf16.msra.mxu0 %v1544
        %1597 = vmatprep.subr.bf16.mxu0 %v1547
        %1598 = vmatpush1.bf16.msra.mxu0 %v1546
        %1599 = vmatprep.subr.bf16.mxu0 %v1549
        %1600 = vmatpush1.bf16.msra.mxu0 %v1548
        %1601 = vmatprep.subr.bf16.mxu0 %v1551
        %1602 = vmatpush1.bf16.msra.mxu0 %v1550
        %1603 = vmatprep.subr.bf16.mxu0 %v1553
        %1604 = vmatpush1.bf16.msra.mxu0 %v1552
        %1605 = vmatprep.subr.bf16.mxu0 %v1555
        %1606 = vmatpush1.bf16.msra.mxu0 %v1554
        %1607 = vmatprep.subr.bf16.mxu0 %v1557
        %1608 = vmatpush1.bf16.msra.mxu0 %v1556
        %1609 = vmatprep.subr.bf16.mxu0 %v1559
        %1610 = vmatpush1.bf16.msra.mxu0 %v1558
        %1611 = vmatprep.subr.bf16.mxu0 %v1589
        %1612 = vmatpush1.bf16.msra.mxu0 %v1586
        %1613 = vmatprep.subr.bf16.mxu0 0
        %1614 = vmatpush1.bf16.msra.mxu0 0
        %1615 = vmatprep.subr.bf16.mxu0 0
        %1616 = vmatpush1.bf16.msra.mxu0 0
        %1617 = vmatprep.subr.bf16.mxu0 0
        %1618 = vmatpush1.bf16.msra.mxu0 0
        %1619 = vmatprep.subr.bf16.mxu0 0
        %1620 = vmatpush1.bf16.msra.mxu0 0
        %1621 = vmatprep.subr.bf16.mxu0 0
        %1622 = vmatpush1.bf16.msra.mxu0 0
        %1623 = vmatprep.mubr.bf16.mxu0 %v1583
        %1624 = vmatmul.mubr.bf16.gmra.mrb[0].mxu0 %v1472
        %v1625 = vpop.f32.mrb[0].mxu0
        %v1626 = vadd.f32 0.0, %v1625
        %v1627 = vpop.f32.mrb[0].mxu0
        %v1628 = vadd.f32 0.0, %v1627
        %v1629 = vpop.f32.mrb[0].mxu0
        %v1630 = vadd.f32 0.0, %v1629
        %v1631 = vpop.f32.mrb[0].mxu0
        %v1632 = vadd.f32 0.0, %v1631
        %1633 = vdwg.mxu0
        %v1634 = vadd.f32 %v1444, %v1626
        %v1635 = vadd.f32 %v1445, %v1628
        %v1636 = vadd.f32 %v1446, %v1630
        %v1637 = vadd.f32 %v1447, %v1632
        %s1638 = scalar_lea.vmem %s5, 672
        %v1639 = vld [vmem:[%s1638] sm:$0xff]
        %v1640 = vld [vmem:[%s1638 + $0x8] sm:$0xff]
        %v1641 = vld [vmem:[%s1638 + $0x10] sm:$0xff]
        %v1642 = vld [vmem:[%s1638 + $0x18] sm:$0xff]
        %v1643 = vld [vmem:[%s1638 + $0x20] sm:$0xff]
        %v1644 = vld [vmem:[%s1638 + $0x28] sm:$0xff]
        %v1645 = vld [vmem:[%s1638 + $0x30] sm:$0xff]
        %v1646 = vld [vmem:[%s1638 + $0x38] sm:$0xff]
        %v1647 = vld [vmem:[%s1638 + $0x40] sm:$0xff]
        %v1648 = vld [vmem:[%s1638 + $0x48] sm:$0xff]
        %v1649 = vld [vmem:[%s1638 + $0x50] sm:$0xff]
        %v1650 = vld [vmem:[%s1638 + $0x58] sm:$0xff]
        %v1651 = vld [vmem:[%s1638 + $0x60] sm:$0xff]
        %v1652 = vld [vmem:[%s1638 + $0x68] sm:$0xff]
        %v1653 = vld [vmem:[%s1638 + $0x70] sm:$0xff]
        %v1654 = vld [vmem:[%s1638 + $0x78] sm:$0xff]
        %v1655 = vld [vmem:[%s1638 + $0x80] sm:$0xff]
        %v1656 = vld [vmem:[%s1638 + $0x88] sm:$0xff]
        %v1657 = vld [vmem:[%s1638 + $0x90] sm:$0xff]
        %v1658 = vld [vmem:[%s1638 + $0x98] sm:$0xff]
        %v1659 = vld [vmem:[%s1638 + $0xa0] sm:$0xff]
        %v1660 = vrot.slane %v882, 2
        %v1661 = vrot.slane %v883, 2
        %v1684 = vunpack.c.l.b16 %v1639
        %v1685 = vunpack.c.h.b16 %v1639
        %v1686 = vunpack.c.l.b16 %v1640
        %v1687 = vunpack.c.h.b16 %v1640
        %v1688 = vunpack.c.l.b16 %v1641
        %v1689 = vunpack.c.h.b16 %v1641
        %v1690 = vunpack.c.l.b16 %v1642
        %v1691 = vunpack.c.h.b16 %v1642
        %v1692 = vunpack.c.l.b16 %v1643
        %v1693 = vunpack.c.h.b16 %v1643
        %v1694 = vunpack.c.l.b16 %v1644
        %v1695 = vunpack.c.h.b16 %v1644
        %v1696 = vunpack.c.l.b16 %v1645
        %v1697 = vunpack.c.h.b16 %v1645
        %v1698 = vunpack.c.l.b16 %v1646
        %v1699 = vunpack.c.h.b16 %v1646
        %v1700 = vunpack.c.l.b16 %v1647
        %v1701 = vunpack.c.h.b16 %v1647
        %v1702 = vunpack.c.l.b16 %v1648
        %v1703 = vunpack.c.h.b16 %v1648
        %v1704 = vunpack.c.l.b16 %v1649
        %v1705 = vunpack.c.h.b16 %v1649
        %v1706 = vunpack.c.l.b16 %v1650
        %v1707 = vunpack.c.h.b16 %v1650
        %v1708 = vunpack.c.l.b16 %v1651
        %v1709 = vunpack.c.h.b16 %v1651
        %v1710 = vunpack.c.l.b16 %v1652
        %v1711 = vunpack.c.h.b16 %v1652
        %v1712 = vunpack.c.l.b16 %v1653
        %v1713 = vunpack.c.h.b16 %v1653
        %v1714 = vunpack.c.l.b16 %v1654
        %v1715 = vunpack.c.h.b16 %v1654
        %v1716 = vunpack.c.l.b16 %v1655
        %v1717 = vunpack.c.h.b16 %v1655
        %v1718 = vunpack.c.l.b16 %v1656
        %v1719 = vunpack.c.h.b16 %v1656
        %v1720 = vunpack.c.l.b16 %v1657
        %v1721 = vunpack.c.h.b16 %v1657
        %v1722 = vunpack.c.l.b16 %v1658
        %v1723 = vunpack.c.h.b16 %v1658
        %v1724 = vunpack.c.l.b16 %v1659
        %v1725 = vunpack.c.h.b16 %v1659
        %v1726 = vpack.c.b16 %v1686, %v1684
        %v1727 = vpack.c.b16 %v1687, %v1685
        %v1728 = vpack.c.b16 %v1690, %v1688
        %v1729 = vpack.c.b16 %v1691, %v1689
        %v1730 = vpack.c.b16 %v1694, %v1692
        %v1731 = vpack.c.b16 %v1695, %v1693
        %v1732 = vpack.c.b16 %v1698, %v1696
        %v1733 = vpack.c.b16 %v1699, %v1697
        %v1734 = vpack.c.b16 %v1702, %v1700
        %v1735 = vpack.c.b16 %v1703, %v1701
        %v1736 = vpack.c.b16 %v1706, %v1704
        %v1737 = vpack.c.b16 %v1707, %v1705
        %v1738 = vpack.c.b16 %v1710, %v1708
        %v1739 = vpack.c.b16 %v1711, %v1709
        %v1740 = vpack.c.b16 %v1714, %v1712
        %v1741 = vpack.c.b16 %v1715, %v1713
        %v1742 = vpack.c.b16 %v1718, %v1716
        %v1743 = vpack.c.b16 %v1719, %v1717
        %v1744 = vpack.c.b16 %v1722, %v1720
        %v1745 = vpack.c.b16 %v1723, %v1721
        %v1746 = vpack.c.b16 %v1724, %v1724
        %v1747 = vpack.c.b16 %v1725, %v1725
        %v1769 = vsel %vm1047, %v1661, 0
        %v1772 = vand.u32 %v1746, %v1054
        %v1775 = vand.u32 %v1747, %v1054
        %1777 = vmatprep.subr.bf16.mxu0 %v1727
        %1778 = vmatpush1.bf16.msra.mxu0 %v1726
        %1779 = vmatprep.subr.bf16.mxu0 %v1729
        %1780 = vmatpush1.bf16.msra.mxu0 %v1728
        %1781 = vmatprep.subr.bf16.mxu0 %v1731
        %1782 = vmatpush1.bf16.msra.mxu0 %v1730
        %1783 = vmatprep.subr.bf16.mxu0 %v1733
        %1784 = vmatpush1.bf16.msra.mxu0 %v1732
        %1785 = vmatprep.subr.bf16.mxu0 %v1735
        %1786 = vmatpush1.bf16.msra.mxu0 %v1734
        %1787 = vmatprep.subr.bf16.mxu0 %v1737
        %1788 = vmatpush1.bf16.msra.mxu0 %v1736
        %1789 = vmatprep.subr.bf16.mxu0 %v1739
        %1790 = vmatpush1.bf16.msra.mxu0 %v1738
        %1791 = vmatprep.subr.bf16.mxu0 %v1741
        %1792 = vmatpush1.bf16.msra.mxu0 %v1740
        %1793 = vmatprep.subr.bf16.mxu0 %v1743
        %1794 = vmatpush1.bf16.msra.mxu0 %v1742
        %1795 = vmatprep.subr.bf16.mxu0 %v1745
        %1796 = vmatpush1.bf16.msra.mxu0 %v1744
        %1797 = vmatprep.subr.bf16.mxu0 %v1775
        %1798 = vmatpush1.bf16.msra.mxu0 %v1772
        %1799 = vmatprep.subr.bf16.mxu0 0
        %1800 = vmatpush1.bf16.msra.mxu0 0
        %1801 = vmatprep.subr.bf16.mxu0 0
        %1802 = vmatpush1.bf16.msra.mxu0 0
        %1803 = vmatprep.subr.bf16.mxu0 0
        %1804 = vmatpush1.bf16.msra.mxu0 0
        %1805 = vmatprep.subr.bf16.mxu0 0
        %1806 = vmatpush1.bf16.msra.mxu0 0
        %1807 = vmatprep.subr.bf16.mxu0 0
        %1808 = vmatpush1.bf16.msra.mxu0 0
        %1809 = vmatprep.mubr.bf16.mxu0 %v1769
        %1810 = vmatmul.mubr.bf16.gmra.mrb[0].mxu0 %v1660
        %v1811 = vpop.f32.mrb[0].mxu0
        %v1812 = vadd.f32 0.0, %v1811
        %v1813 = vpop.f32.mrb[0].mxu0
        %v1814 = vadd.f32 0.0, %v1813
        %v1815 = vpop.f32.mrb[0].mxu0
        %v1816 = vadd.f32 0.0, %v1815
        %v1817 = vpop.f32.mrb[0].mxu0
        %v1818 = vadd.f32 0.0, %v1817
        %1819 = vdwg.mxu0
        %v1820 = vadd.f32 %v1634, %v1812
        %v1821 = vadd.f32 %v1635, %v1814
        %v1822 = vadd.f32 %v1636, %v1816
        %v1823 = vadd.f32 %v1637, %v1818
        %v1824 = vld [vmem:[%s6] sm:$0x3]
        %v1826 = vlaneseq
        %v1827 = vshrl.u32 %v1826, 7
        %v1828 = vsub.s32 0, %v1827
        %v1829 = vrot.slane %v1824, %v1828
        %v1830 = vlaneseq
        %v1831 = vshrl.u32 %v1830, 7
        %v1832 = vsub.s32 1, %v1831
        %v1833 = vrot.slane %v1824, %v1832
        %v1836 = vadd.f32 %v1820, %v1829
        %v1837 = vadd.f32 %v1821, %v1833
        %v1838 = vadd.f32 %v1822, %v1829
        %v1839 = vadd.f32 %v1823, %v1833
        %v1840 = vmax.f32 %v1836, 0.0
        %v1841 = vmax.f32 %v1837, 0.0
        %v1842 = vmax.f32 %v1838, 0.0
        %v1843 = vmax.f32 %v1839, 0.0
        %1848 = vrot.lane.b32.xlu0 %v1840, 127
        %v1849 = vpop.permute.xlu0 %1848
        %1850 = vrot.lane.b32.xlu0 %v1841, 127
        %v1851 = vpop.permute.xlu0 %1850
        %1852 = vrot.lane.b32.xlu0 %v1842, 127
        %v1853 = vpop.permute.xlu0 %1852
        %1854 = vrot.lane.b32.xlu0 %v1843, 127
        %v1855 = vpop.permute.xlu0 %1854
        %v1856 = vsel %vm739, %v1849, %v1851
        %v1857 = vsel %vm739, %v1853, %v1855
        %v1862 = vmax.f32 %v1840, %v1856
        %v1863 = vmax.f32 %v1841, %v1851
        %v1864 = vmax.f32 %v1842, %v1857
        %v1865 = vmax.f32 %v1843, %v1855
        %v1866 = vpack.c.bf16 %v1864, %v1862
        %v1867 = vpack.c.bf16 %v1865, %v1863
        %v1868 = vld [vmem:[%s7] sm:$0x7]
        %vm1869 = vcmask 80896
        %v1871 = vsel %vm1869, %v1868, 0
        %vm1873 = vcmask 1044480
        %v1875 = vsel %vm1873, %v1866, 0
        %v1878 = vsel %vm1873, %v1867, 0
        %1880 = vmatprep.subr.bf16.mxu0 %v1878
        %1881 = vmatpush1.bf16.msra.mxu0 %v1875
        %1882 = vmatprep.subr.bf16.mxu0 0
        %1883 = vmatpush1.bf16.msra.mxu0 0
        %1884 = vmatprep.subr.bf16.mxu0 0
        %1885 = vmatpush1.bf16.msra.mxu0 0
        %1886 = vmatprep.subr.bf16.mxu0 0
        %1887 = vmatpush1.bf16.msra.mxu0 0
        %1888 = vmatprep.subr.bf16.mxu0 0
        %1889 = vmatpush1.bf16.msra.mxu0 0
        %1890 = vmatprep.subr.bf16.mxu0 0
        %1891 = vmatpush1.bf16.msra.mxu0 0
        %1892 = vmatprep.subr.bf16.mxu0 0
        %1893 = vmatpush1.bf16.msra.mxu0 0
        %1894 = vmatprep.subr.bf16.mxu0 0
        %1895 = vmatpush1.bf16.msra.mxu0 0
        %1896 = vmatprep.subr.bf16.mxu0 0
        %1897 = vmatpush1.bf16.msra.mxu0 0
        %1898 = vmatprep.subr.bf16.mxu0 0
        %1899 = vmatpush1.bf16.msra.mxu0 0
        %1900 = vmatprep.subr.bf16.mxu0 0
        %1901 = vmatpush1.bf16.msra.mxu0 0
        %1902 = vmatprep.subr.bf16.mxu0 0
        %1903 = vmatpush1.bf16.msra.mxu0 0
        %1904 = vmatprep.subr.bf16.mxu0 0
        %1905 = vmatpush1.bf16.msra.mxu0 0
        %1906 = vmatprep.subr.bf16.mxu0 0
        %1907 = vmatpush1.bf16.msra.mxu0 0
        %1908 = vmatprep.subr.bf16.mxu0 0
        %1909 = vmatpush1.bf16.msra.mxu0 0
        %1910 = vmatprep.subr.bf16.mxu0 0
        %1911 = vmatpush1.bf16.msra.mxu0 0
        %1912 = vmatprep.mubr.bf16.mxu0 0
        %1913 = vmatmul.mubr.bf16.gmra.mrb[0].mxu0 %v1871
        %v1914 = vpop.f32.mrb[0].mxu0
        %v1915 = vadd.f32 0.0, %v1914
        %v1916 = vpop.f32.mrb[0].mxu0
        %v1917 = vadd.f32 0.0, %v1916
        %v1918 = vpop.f32.mrb[0].mxu0
        %v1919 = vpop.f32.mrb[0].mxu0
        %1920 = vdwg.mxu0
        %v1921 = vld [vmem:[%s8] sm:$0x7]
        %v1923 = vsel %vm1869, %v1921, 0
        %1925 = vmatprep.subr.bf16.mxu0 %v1878
        %1926 = vmatpush1.bf16.msra.mxu0 %v1875
        %1927 = vmatprep.subr.bf16.mxu0 0
        %1928 = vmatpush1.bf16.msra.mxu0 0
        %1929 = vmatprep.subr.bf16.mxu0 0
        %1930 = vmatpush1.bf16.msra.mxu0 0
        %1931 = vmatprep.subr.bf16.mxu0 0
        %1932 = vmatpush1.bf16.msra.mxu0 0
        %1933 = vmatprep.subr.bf16.mxu0 0
        %1934 = vmatpush1.bf16.msra.mxu0 0
        %1935 = vmatprep.subr.bf16.mxu0 0
        %1936 = vmatpush1.bf16.msra.mxu0 0
        %1937 = vmatprep.subr.bf16.mxu0 0
        %1938 = vmatpush1.bf16.msra.mxu0 0
        %1939 = vmatprep.subr.bf16.mxu0 0
        %1940 = vmatpush1.bf16.msra.mxu0 0
        %1941 = vmatprep.subr.bf16.mxu0 0
        %1942 = vmatpush1.bf16.msra.mxu0 0
        %1943 = vmatprep.subr.bf16.mxu0 0
        %1944 = vmatpush1.bf16.msra.mxu0 0
        %1945 = vmatprep.subr.bf16.mxu0 0
        %1946 = vmatpush1.bf16.msra.mxu0 0
        %1947 = vmatprep.subr.bf16.mxu0 0
        %1948 = vmatpush1.bf16.msra.mxu0 0
        %1949 = vmatprep.subr.bf16.mxu0 0
        %1950 = vmatpush1.bf16.msra.mxu0 0
        %1951 = vmatprep.subr.bf16.mxu0 0
        %1952 = vmatpush1.bf16.msra.mxu0 0
        %1953 = vmatprep.subr.bf16.mxu0 0
        %1954 = vmatpush1.bf16.msra.mxu0 0
        %1955 = vmatprep.subr.bf16.mxu0 0
        %1956 = vmatpush1.bf16.msra.mxu0 0
        %1957 = vmatprep.mubr.bf16.mxu0 0
        %1958 = vmatmul.mubr.bf16.gmra.mrb[0].mxu0 %v1923
        %v1959 = vpop.f32.mrb[0].mxu0
        %v1960 = vadd.f32 0.0, %v1959
        %v1961 = vpop.f32.mrb[0].mxu0
        %v1962 = vadd.f32 0.0, %v1961
        %v1963 = vpop.f32.mrb[0].mxu0
        %v1964 = vpop.f32.mrb[0].mxu0
        %1965 = vdwg.mxu0
        %v1966 = vmax.f32 %v1915, %v1960
        %v1967 = vmax.f32 %v1917, %v1962
        %v1970 = vcombine.low %v1966, %v1967
        %v1972 = vunpack.c.l.s4 1966171168
        %v1973 = vunpack.c.0.s8 %v1972
        %v1974 = vlaneseq
        %v1975 = vshrl.u32 %v1974, 7
        %v1976 = vsub.s32 %v1973, %v1975
        %v1977 = vrot.slane %v1970, %v1976
        %v1979 = vunpack.c.l.s4 1966171168
        %v1980 = vunpack.c.0.s8 %v1979
        %v1981 = vlaneseq
        %v1982 = vshrl.u32 %v1981, 7
        %v1983 = vsub.s32 %v1980, %v1982
        %v1984 = vrot.slane %v1977, %v1983
        %v1986 = vlaneseq
        %vm1987 = vcmp.ge.s32.totalorder %v1986, 0
        %vm1988 = vcmp.lt.s32.totalorder %v1986, 159
        %vm1989 = vmand %vm1987, %vm1988
        %1990 = vst.msk [vmem:[#allocation2] sm:$0x3] %vm1989, %v1984
        %v1991 = vcombine.high %v1977, %v1977
        %v1993 = vunpack.c.l.s4 1966171168
        %v1994 = vunpack.c.0.s8 %v1993
        %v1995 = vlaneseq
        %v1996 = vshrl.u32 %v1995, 7
        %v1997 = vsub.s32 %v1994, %v1996
        %v1998 = vrot.slane %v1991, %v1997
        %s2000 = scalar_lea.vmem [#allocation2], 2
        %2001 = vst.msk [vmem:[%s2000] sm:$0x3] %vm1989, %v1998
        %v2002 = vcombine.high %v1984, %v1984
        %s2004 = scalar_lea.vmem [#allocation2], 4
        %2005 = vst.msk [vmem:[%s2004] sm:$0x3] %vm1989, %v2002
        %v2006 = vcombine.high %v1998, %v1998
        %s2008 = scalar_lea.vmem [#allocation2], 6
        %2009 = vst.msk [vmem:[%s2008] sm:$0x3] %vm1989, %v2006
        %v2010 = vcombine.high %v1966, %v1967
        %v2012 = vunpack.c.l.s4 1966171168
        %v2013 = vunpack.c.0.s8 %v2012
        %v2014 = vlaneseq
        %v2015 = vshrl.u32 %v2014, 7
        %v2016 = vsub.s32 %v2013, %v2015
        %v2017 = vrot.slane %v2010, %v2016
        %v2019 = vunpack.c.l.s4 1966171168
        %v2020 = vunpack.c.0.s8 %v2019
        %v2021 = vlaneseq
        %v2022 = vshrl.u32 %v2021, 7
        %v2023 = vsub.s32 %v2020, %v2022
        %v2024 = vrot.slane %v2017, %v2023
        %s2026 = scalar_lea.vmem [#allocation2], 8
        %2027 = vst.msk [vmem:[%s2026] sm:$0x3] %vm1989, %v2024
        %v2028 = vld [vmem:[#allocation2] sm:$0x3]
        %v2030 = vlaneseq
        %v2031 = vshrl.u32 %v2030, 7
        %v2032 = vsub.s32 0, %v2031
        %v2033 = vrot.slane %v2028, %v2032
        %v2034 = vlaneseq
        %v2035 = vshrl.u32 %v2034, 7
        %v2036 = vsub.s32 1, %v2035
        %v2037 = vrot.slane %v2028, %v2036
        %v2040 = vpack.c.bf16 %v2033, %v2033
        %v2041 = vpack.c.bf16 %v2037, %v2037
        %v2042 = vld [vmem:[%s9] sm:$0xf]
        %v2043 = vld [vmem:[%s9 + $0x4] sm:$0xf]
        %v2044 = vld [vmem:[%s9 + $0x8] sm:$0xf]
        %v2045 = vld [vmem:[%s9 + $0xc] sm:$0xf]
        %v2046 = vld [vmem:[%s9 + $0x10] sm:$0xf]
        %v2047 = vld [vmem:[%s9 + $0x14] sm:$0xf]
        %v2048 = vld [vmem:[%s9 + $0x18] sm:$0xf]
        %v2049 = vld [vmem:[%s9 + $0x1c] sm:$0xf]
        %v2050 = vld [vmem:[%s9 + $0x20] sm:$0xf]
        %v2051 = vld [vmem:[%s9 + $0x24] sm:$0xf]
        %v2052 = vld [vmem:[%s9 + $0x28] sm:$0xf]
        %v2053 = vld [vmem:[%s9 + $0x2c] sm:$0xf]
        %v2054 = vld [vmem:[%s9 + $0x30] sm:$0xf]
        %v2055 = vld [vmem:[%s9 + $0x34] sm:$0xf]
        %v2056 = vld [vmem:[%s9 + $0x38] sm:$0xf]
        %v2057 = vld [vmem:[%s9 + $0x3c] sm:$0xf]
        %v2058 = vld [vmem:[%s9 + $0x40] sm:$0xf]
        %v2059 = vld [vmem:[%s9 + $0x44] sm:$0xf]
        %v2060 = vld [vmem:[%s9 + $0x48] sm:$0xf]
        %v2061 = vld [vmem:[%s9 + $0x4c] sm:$0xf]
        %v2062 = vld [vmem:[%s2000] sm:$0x3]
        %v2064 = vlaneseq
        %v2065 = vshrl.u32 %v2064, 7
        %v2066 = vsub.s32 0, %v2065
        %v2067 = vrot.slane %v2062, %v2066
        %v2068 = vlaneseq
        %v2069 = vshrl.u32 %v2068, 7
        %v2070 = vsub.s32 1, %v2069
        %v2071 = vrot.slane %v2062, %v2070
        %v2074 = vpack.c.bf16 %v2067, %v2067
        %v2075 = vpack.c.bf16 %v2071, %v2071
        %s2076 = scalar_lea.vmem %s9, 80
        %v2077 = vld [vmem:[%s2076] sm:$0xf]
        %v2078 = vld [vmem:[%s2076 + $0x4] sm:$0xf]
        %v2079 = vld [vmem:[%s2076 + $0x8] sm:$0xf]
        %v2080 = vld [vmem:[%s2076 + $0xc] sm:$0xf]
        %v2081 = vld [vmem:[%s2076 + $0x10] sm:$0xf]
        %v2082 = vld [vmem:[%s2076 + $0x14] sm:$0xf]
        %v2083 = vld [vmem:[%s2076 + $0x18] sm:$0xf]
        %v2084 = vld [vmem:[%s2076 + $0x1c] sm:$0xf]
        %v2085 = vld [vmem:[%s2076 + $0x20] sm:$0xf]
        %v2086 = vld [vmem:[%s2076 + $0x24] sm:$0xf]
        %v2087 = vld [vmem:[%s2076 + $0x28] sm:$0xf]
        %v2088 = vld [vmem:[%s2076 + $0x2c] sm:$0xf]
        %v2089 = vld [vmem:[%s2076 + $0x30] sm:$0xf]
        %v2090 = vld [vmem:[%s2076 + $0x34] sm:$0xf]
        %v2091 = vld [vmem:[%s2076 + $0x38] sm:$0xf]
        %v2092 = vld [vmem:[%s2076 + $0x3c] sm:$0xf]
        %v2093 = vld [vmem:[%s2076 + $0x40] sm:$0xf]
        %v2094 = vld [vmem:[%s2076 + $0x44] sm:$0xf]
        %v2095 = vld [vmem:[%s2076 + $0x48] sm:$0xf]
        %v2096 = vld [vmem:[%s2076 + $0x4c] sm:$0xf]
        %v2117 = vunpack.c.l.b16 %v2077
        %v2118 = vunpack.c.l.b16 %v2078
        %v2119 = vunpack.c.l.b16 %v2079
        %v2120 = vunpack.c.l.b16 %v2080
        %v2121 = vunpack.c.l.b16 %v2081
        %v2122 = vunpack.c.l.b16 %v2082
        %v2123 = vunpack.c.l.b16 %v2083
        %v2124 = vunpack.c.l.b16 %v2084
        %v2125 = vunpack.c.l.b16 %v2085
        %v2126 = vunpack.c.l.b16 %v2086
        %v2127 = vunpack.c.l.b16 %v2087
        %v2128 = vunpack.c.l.b16 %v2088
        %v2129 = vunpack.c.l.b16 %v2089
        %v2130 = vunpack.c.l.b16 %v2090
        %v2131 = vunpack.c.l.b16 %v2091
        %v2132 = vunpack.c.l.b16 %v2092
        %v2133 = vunpack.c.l.b16 %v2093
        %v2134 = vunpack.c.l.b16 %v2094
        %v2135 = vunpack.c.l.b16 %v2095
        %v2136 = vunpack.c.l.b16 %v2096
        %v2137 = vpack.c.b16 %v2118, %v2117
        %v2138 = vpack.c.b16 %v2120, %v2119
        %v2139 = vpack.c.b16 %v2122, %v2121
        %v2140 = vpack.c.b16 %v2124, %v2123
        %v2141 = vpack.c.b16 %v2126, %v2125
        %v2142 = vpack.c.b16 %v2128, %v2127
        %v2143 = vpack.c.b16 %v2130, %v2129
        %v2144 = vpack.c.b16 %v2132, %v2131
        %v2145 = vpack.c.b16 %v2134, %v2133
        %v2146 = vpack.c.b16 %v2136, %v2135
        %vm2156 = vcmask 252928
        %v2158 = vsel %vm2156, %v2075, 0
        %vm2160 = vcmask 1046528
        %vm2161 = vcmask 1047552
        %v2162 = vsel %vm2160, 4294967295, 65535
        %v2163 = vsel %vm2161, %v2162, 0
        %v2165 = vand.u32 %v2146, %v2163
        %2167 = vmatprep.subr.bf16.mxu0 0
        %2168 = vmatpush1.bf16.msra.mxu0 %v2137
        %2169 = vmatprep.subr.bf16.mxu0 0
        %2170 = vmatpush1.bf16.msra.mxu0 %v2138
        %2171 = vmatprep.subr.bf16.mxu0 0
        %2172 = vmatpush1.bf16.msra.mxu0 %v2139
        %2173 = vmatprep.subr.bf16.mxu0 0
        %2174 = vmatpush1.bf16.msra.mxu0 %v2140
        %2175 = vmatprep.subr.bf16.mxu0 0
        %2176 = vmatpush1.bf16.msra.mxu0 %v2141
        %2177 = vmatprep.subr.bf16.mxu0 0
        %2178 = vmatpush1.bf16.msra.mxu0 %v2142
        %2179 = vmatprep.subr.bf16.mxu0 0
        %2180 = vmatpush1.bf16.msra.mxu0 %v2143
        %2181 = vmatprep.subr.bf16.mxu0 0
        %2182 = vmatpush1.bf16.msra.mxu0 %v2144
        %2183 = vmatprep.subr.bf16.mxu0 0
        %2184 = vmatpush1.bf16.msra.mxu0 %v2145
        %2185 = vmatprep.subr.bf16.mxu0 0
        %2186 = vmatpush1.bf16.msra.mxu0 %v2165
        %2187 = vmatprep.subr.bf16.mxu0 0
        %2188 = vmatpush1.bf16.msra.mxu0 0
        %2189 = vmatprep.subr.bf16.mxu0 0
        %2190 = vmatpush1.bf16.msra.mxu0 0
        %2191 = vmatprep.subr.bf16.mxu0 0
        %2192 = vmatpush1.bf16.msra.mxu0 0
        %2193 = vmatprep.subr.bf16.mxu0 0
        %2194 = vmatpush1.bf16.msra.mxu0 0
        %2195 = vmatprep.subr.bf16.mxu0 0
        %2196 = vmatpush1.bf16.msra.mxu0 0
        %2197 = vmatprep.subr.bf16.mxu0 0
        %2198 = vmatpush1.bf16.msra.mxu0 0
        %2199 = vmatprep.mubr.bf16.mxu0 %v2158
        %2200 = vmatmul.mubr.bf16.gmra.mrb[0].mxu0 %v2074
        %v2201 = vpop.f32.mrb[0].mxu0
        %v2202 = vadd.f32 0.0, %v2201
        %v2203 = vpop.f32.mrb[0].mxu0
        %v2204 = vpop.f32.mrb[0].mxu0
        %v2205 = vpop.f32.mrb[0].mxu0
        %2206 = vdwg.mxu0
        %v2227 = vunpack.c.l.b16 %v2042
        %v2228 = vunpack.c.l.b16 %v2043
        %v2229 = vunpack.c.l.b16 %v2044
        %v2230 = vunpack.c.l.b16 %v2045
        %v2231 = vunpack.c.l.b16 %v2046
        %v2232 = vunpack.c.l.b16 %v2047
        %v2233 = vunpack.c.l.b16 %v2048
        %v2234 = vunpack.c.l.b16 %v2049
        %v2235 = vunpack.c.l.b16 %v2050
        %v2236 = vunpack.c.l.b16 %v2051
        %v2237 = vunpack.c.l.b16 %v2052
        %v2238 = vunpack.c.l.b16 %v2053
        %v2239 = vunpack.c.l.b16 %v2054
        %v2240 = vunpack.c.l.b16 %v2055
        %v2241 = vunpack.c.l.b16 %v2056
        %v2242 = vunpack.c.l.b16 %v2057
        %v2243 = vunpack.c.l.b16 %v2058
        %v2244 = vunpack.c.l.b16 %v2059
        %v2245 = vunpack.c.l.b16 %v2060
        %v2246 = vunpack.c.l.b16 %v2061
        %v2247 = vpack.c.b16 %v2228, %v2227
        %v2248 = vpack.c.b16 %v2230, %v2229
        %v2249 = vpack.c.b16 %v2232, %v2231
        %v2250 = vpack.c.b16 %v2234, %v2233
        %v2251 = vpack.c.b16 %v2236, %v2235
        %v2252 = vpack.c.b16 %v2238, %v2237
        %v2253 = vpack.c.b16 %v2240, %v2239
        %v2254 = vpack.c.b16 %v2242, %v2241
        %v2255 = vpack.c.b16 %v2244, %v2243
        %v2256 = vpack.c.b16 %v2246, %v2245
        %v2267 = vsel %vm2156, %v2041, 0
        %v2270 = vand.u32 %v2256, %v2163
        %2272 = vmatprep.subr.bf16.mxu0 0
        %2273 = vmatpush1.bf16.msra.mxu0 %v2247
        %2274 = vmatprep.subr.bf16.mxu0 0
        %2275 = vmatpush1.bf16.msra.mxu0 %v2248
        %2276 = vmatprep.subr.bf16.mxu0 0
        %2277 = vmatpush1.bf16.msra.mxu0 %v2249
        %2278 = vmatprep.subr.bf16.mxu0 0
        %2279 = vmatpush1.bf16.msra.mxu0 %v2250
        %2280 = vmatprep.subr.bf16.mxu0 0
        %2281 = vmatpush1.bf16.msra.mxu0 %v2251
        %2282 = vmatprep.subr.bf16.mxu0 0
        %2283 = vmatpush1.bf16.msra.mxu0 %v2252
        %2284 = vmatprep.subr.bf16.mxu0 0
        %2285 = vmatpush1.bf16.msra.mxu0 %v2253
        %2286 = vmatprep.subr.bf16.mxu0 0
        %2287 = vmatpush1.bf16.msra.mxu0 %v2254
        %2288 = vmatprep.subr.bf16.mxu0 0
        %2289 = vmatpush1.bf16.msra.mxu0 %v2255
        %2290 = vmatprep.subr.bf16.mxu0 0
        %2291 = vmatpush1.bf16.msra.mxu0 %v2270
        %2292 = vmatprep.subr.bf16.mxu0 0
        %2293 = vmatpush1.bf16.msra.mxu0 0
        %2294 = vmatprep.subr.bf16.mxu0 0
        %2295 = vmatpush1.bf16.msra.mxu0 0
        %2296 = vmatprep.subr.bf16.mxu0 0
        %2297 = vmatpush1.bf16.msra.mxu0 0
        %2298 = vmatprep.subr.bf16.mxu0 0
        %2299 = vmatpush1.bf16.msra.mxu0 0
        %2300 = vmatprep.subr.bf16.mxu0 0
        %2301 = vmatpush1.bf16.msra.mxu0 0
        %2302 = vmatprep.subr.bf16.mxu0 0
        %2303 = vmatpush1.bf16.msra.mxu0 0
        %2304 = vmatprep.mubr.bf16.mxu0 %v2267
        %2305 = vmatmul.mubr.bf16.gmra.mrb[0].mxu0 %v2040
        %v2306 = vpop.f32.mrb[0].mxu0
        %v2307 = vadd.f32 %v2202, %v2306
        %v2308 = vpop.f32.mrb[0].mxu0
        %v2309 = vpop.f32.mrb[0].mxu0
        %v2310 = vpop.f32.mrb[0].mxu0
        %2311 = vdwg.mxu0
        %v2312 = vld [vmem:[%s2004] sm:$0x3]
        %v2314 = vlaneseq
        %v2315 = vshrl.u32 %v2314, 7
        %v2316 = vsub.s32 0, %v2315
        %v2317 = vrot.slane %v2312, %v2316
        %v2318 = vlaneseq
        %v2319 = vshrl.u32 %v2318, 7
        %v2320 = vsub.s32 1, %v2319
        %v2321 = vrot.slane %v2312, %v2320
        %v2324 = vpack.c.bf16 %v2317, %v2317
        %v2325 = vpack.c.bf16 %v2321, %v2321
        %s2326 = scalar_lea.vmem %s9, 160
        %v2327 = vld [vmem:[%s2326] sm:$0xf]
        %v2328 = vld [vmem:[%s2326 + $0x4] sm:$0xf]
        %v2329 = vld [vmem:[%s2326 + $0x8] sm:$0xf]
        %v2330 = vld [vmem:[%s2326 + $0xc] sm:$0xf]
        %v2331 = vld [vmem:[%s2326 + $0x10] sm:$0xf]
        %v2332 = vld [vmem:[%s2326 + $0x14] sm:$0xf]
        %v2333 = vld [vmem:[%s2326 + $0x18] sm:$0xf]
        %v2334 = vld [vmem:[%s2326 + $0x1c] sm:$0xf]
        %v2335 = vld [vmem:[%s2326 + $0x20] sm:$0xf]
        %v2336 = vld [vmem:[%s2326 + $0x24] sm:$0xf]
        %v2337 = vld [vmem:[%s2326 + $0x28] sm:$0xf]
        %v2338 = vld [vmem:[%s2326 + $0x2c] sm:$0xf]
        %v2339 = vld [vmem:[%s2326 + $0x30] sm:$0xf]
        %v2340 = vld [vmem:[%s2326 + $0x34] sm:$0xf]
        %v2341 = vld [vmem:[%s2326 + $0x38] sm:$0xf]
        %v2342 = vld [vmem:[%s2326 + $0x3c] sm:$0xf]
        %v2343 = vld [vmem:[%s2326 + $0x40] sm:$0xf]
        %v2344 = vld [vmem:[%s2326 + $0x44] sm:$0xf]
        %v2345 = vld [vmem:[%s2326 + $0x48] sm:$0xf]
        %v2346 = vld [vmem:[%s2326 + $0x4c] sm:$0xf]
        %v2367 = vunpack.c.l.b16 %v2327
        %v2368 = vunpack.c.l.b16 %v2328
        %v2369 = vunpack.c.l.b16 %v2329
        %v2370 = vunpack.c.l.b16 %v2330
        %v2371 = vunpack.c.l.b16 %v2331
        %v2372 = vunpack.c.l.b16 %v2332
        %v2373 = vunpack.c.l.b16 %v2333
        %v2374 = vunpack.c.l.b16 %v2334
        %v2375 = vunpack.c.l.b16 %v2335
        %v2376 = vunpack.c.l.b16 %v2336
        %v2377 = vunpack.c.l.b16 %v2337
        %v2378 = vunpack.c.l.b16 %v2338
        %v2379 = vunpack.c.l.b16 %v2339
        %v2380 = vunpack.c.l.b16 %v2340
        %v2381 = vunpack.c.l.b16 %v2341
        %v2382 = vunpack.c.l.b16 %v2342
        %v2383 = vunpack.c.l.b16 %v2343
        %v2384 = vunpack.c.l.b16 %v2344
        %v2385 = vunpack.c.l.b16 %v2345
        %v2386 = vunpack.c.l.b16 %v2346
        %v2387 = vpack.c.b16 %v2368, %v2367
        %v2388 = vpack.c.b16 %v2370, %v2369
        %v2389 = vpack.c.b16 %v2372, %v2371
        %v2390 = vpack.c.b16 %v2374, %v2373
        %v2391 = vpack.c.b16 %v2376, %v2375
        %v2392 = vpack.c.b16 %v2378, %v2377
        %v2393 = vpack.c.b16 %v2380, %v2379
        %v2394 = vpack.c.b16 %v2382, %v2381
        %v2395 = vpack.c.b16 %v2384, %v2383
        %v2396 = vpack.c.b16 %v2386, %v2385
        %v2407 = vsel %vm2156, %v2325, 0
        %v2410 = vand.u32 %v2396, %v2163
        %2412 = vmatprep.subr.bf16.mxu0 0
        %2413 = vmatpush1.bf16.msra.mxu0 %v2387
        %2414 = vmatprep.subr.bf16.mxu0 0
        %2415 = vmatpush1.bf16.msra.mxu0 %v2388
        %2416 = vmatprep.subr.bf16.mxu0 0
        %2417 = vmatpush1.bf16.msra.mxu0 %v2389
        %2418 = vmatprep.subr.bf16.mxu0 0
        %2419 = vmatpush1.bf16.msra.mxu0 %v2390
        %2420 = vmatprep.subr.bf16.mxu0 0
        %2421 = vmatpush1.bf16.msra.mxu0 %v2391
        %2422 = vmatprep.subr.bf16.mxu0 0
        %2423 = vmatpush1.bf16.msra.mxu0 %v2392
        %2424 = vmatprep.subr.bf16.mxu0 0
        %2425 = vmatpush1.bf16.msra.mxu0 %v2393
        %2426 = vmatprep.subr.bf16.mxu0 0
        %2427 = vmatpush1.bf16.msra.mxu0 %v2394
        %2428 = vmatprep.subr.bf16.mxu0 0
        %2429 = vmatpush1.bf16.msra.mxu0 %v2395
        %2430 = vmatprep.subr.bf16.mxu0 0
        %2431 = vmatpush1.bf16.msra.mxu0 %v2410
        %2432 = vmatprep.subr.bf16.mxu0 0
        %2433 = vmatpush1.bf16.msra.mxu0 0
        %2434 = vmatprep.subr.bf16.mxu0 0
        %2435 = vmatpush1.bf16.msra.mxu0 0
        %2436 = vmatprep.subr.bf16.mxu0 0
        %2437 = vmatpush1.bf16.msra.mxu0 0
        %2438 = vmatprep.subr.bf16.mxu0 0
        %2439 = vmatpush1.bf16.msra.mxu0 0
        %2440 = vmatprep.subr.bf16.mxu0 0
        %2441 = vmatpush1.bf16.msra.mxu0 0
        %2442 = vmatprep.subr.bf16.mxu0 0
        %2443 = vmatpush1.bf16.msra.mxu0 0
        %2444 = vmatprep.mubr.bf16.mxu0 %v2407
        %2445 = vmatmul.mubr.bf16.gmra.mrb[0].mxu0 %v2324
        %v2446 = vpop.f32.mrb[0].mxu0
        %v2447 = vadd.f32 0.0, %v2446
        %v2448 = vpop.f32.mrb[0].mxu0
        %v2449 = vpop.f32.mrb[0].mxu0
        %v2450 = vpop.f32.mrb[0].mxu0
        %2451 = vdwg.mxu0
        %v2452 = vadd.f32 %v2307, %v2447
        %v2453 = vld [vmem:[%s2008] sm:$0x3]
        %v2455 = vlaneseq
        %v2456 = vshrl.u32 %v2455, 7
        %v2457 = vsub.s32 0, %v2456
        %v2458 = vrot.slane %v2453, %v2457
        %v2459 = vlaneseq
        %v2460 = vshrl.u32 %v2459, 7
        %v2461 = vsub.s32 1, %v2460
        %v2462 = vrot.slane %v2453, %v2461
        %v2465 = vpack.c.bf16 %v2458, %v2458
        %v2466 = vpack.c.bf16 %v2462, %v2462
        %s2467 = scalar_lea.vmem %s9, 240
        %v2468 = vld [vmem:[%s2467] sm:$0xf]
        %v2469 = vld [vmem:[%s2467 + $0x4] sm:$0xf]
        %v2470 = vld [vmem:[%s2467 + $0x8] sm:$0xf]
        %v2471 = vld [vmem:[%s2467 + $0xc] sm:$0xf]
        %v2472 = vld [vmem:[%s2467 + $0x10] sm:$0xf]
        %v2473 = vld [vmem:[%s2467 + $0x14] sm:$0xf]
        %v2474 = vld [vmem:[%s2467 + $0x18] sm:$0xf]
        %v2475 = vld [vmem:[%s2467 + $0x1c] sm:$0xf]
        %v2476 = vld [vmem:[%s2467 + $0x20] sm:$0xf]
        %v2477 = vld [vmem:[%s2467 + $0x24] sm:$0xf]
        %v2478 = vld [vmem:[%s2467 + $0x28] sm:$0xf]
        %v2479 = vld [vmem:[%s2467 + $0x2c] sm:$0xf]
        %v2480 = vld [vmem:[%s2467 + $0x30] sm:$0xf]
        %v2481 = vld [vmem:[%s2467 + $0x34] sm:$0xf]
        %v2482 = vld [vmem:[%s2467 + $0x38] sm:$0xf]
        %v2483 = vld [vmem:[%s2467 + $0x3c] sm:$0xf]
        %v2484 = vld [vmem:[%s2467 + $0x40] sm:$0xf]
        %v2485 = vld [vmem:[%s2467 + $0x44] sm:$0xf]
        %v2486 = vld [vmem:[%s2467 + $0x48] sm:$0xf]
        %v2487 = vld [vmem:[%s2467 + $0x4c] sm:$0xf]
        %v2508 = vunpack.c.l.b16 %v2468
        %v2509 = vunpack.c.l.b16 %v2469
        %v2510 = vunpack.c.l.b16 %v2470
        %v2511 = vunpack.c.l.b16 %v2471
        %v2512 = vunpack.c.l.b16 %v2472
        %v2513 = vunpack.c.l.b16 %v2473
        %v2514 = vunpack.c.l.b16 %v2474
        %v2515 = vunpack.c.l.b16 %v2475
        %v2516 = vunpack.c.l.b16 %v2476
        %v2517 = vunpack.c.l.b16 %v2477
        %v2518 = vunpack.c.l.b16 %v2478
        %v2519 = vunpack.c.l.b16 %v2479
        %v2520 = vunpack.c.l.b16 %v2480
        %v2521 = vunpack.c.l.b16 %v2481
        %v2522 = vunpack.c.l.b16 %v2482
        %v2523 = vunpack.c.l.b16 %v2483
        %v2524 = vunpack.c.l.b16 %v2484
        %v2525 = vunpack.c.l.b16 %v2485
        %v2526 = vunpack.c.l.b16 %v2486
        %v2527 = vunpack.c.l.b16 %v2487
        %v2528 = vpack.c.b16 %v2509, %v2508
        %v2529 = vpack.c.b16 %v2511, %v2510
        %v2530 = vpack.c.b16 %v2513, %v2512
        %v2531 = vpack.c.b16 %v2515, %v2514
        %v2532 = vpack.c.b16 %v2517, %v2516
        %v2533 = vpack.c.b16 %v2519, %v2518
        %v2534 = vpack.c.b16 %v2521, %v2520
        %v2535 = vpack.c.b16 %v2523, %v2522
        %v2536 = vpack.c.b16 %v2525, %v2524
        %v2537 = vpack.c.b16 %v2527, %v2526
        %v2548 = vsel %vm2156, %v2466, 0
        %v2551 = vand.u32 %v2537, %v2163
        %2553 = vmatprep.subr.bf16.mxu0 0
        %2554 = vmatpush1.bf16.msra.mxu0 %v2528
        %2555 = vmatprep.subr.bf16.mxu0 0
        %2556 = vmatpush1.bf16.msra.mxu0 %v2529
        %2557 = vmatprep.subr.bf16.mxu0 0
        %2558 = vmatpush1.bf16.msra.mxu0 %v2530
        %2559 = vmatprep.subr.bf16.mxu0 0
        %2560 = vmatpush1.bf16.msra.mxu0 %v2531
        %2561 = vmatprep.subr.bf16.mxu0 0
        %2562 = vmatpush1.bf16.msra.mxu0 %v2532
        %2563 = vmatprep.subr.bf16.mxu0 0
        %2564 = vmatpush1.bf16.msra.mxu0 %v2533
        %2565 = vmatprep.subr.bf16.mxu0 0
        %2566 = vmatpush1.bf16.msra.mxu0 %v2534
        %2567 = vmatprep.subr.bf16.mxu0 0
        %2568 = vmatpush1.bf16.msra.mxu0 %v2535
        %2569 = vmatprep.subr.bf16.mxu0 0
        %2570 = vmatpush1.bf16.msra.mxu0 %v2536
        %2571 = vmatprep.subr.bf16.mxu0 0
        %2572 = vmatpush1.bf16.msra.mxu0 %v2551
        %2573 = vmatprep.subr.bf16.mxu0 0
        %2574 = vmatpush1.bf16.msra.mxu0 0
        %2575 = vmatprep.subr.bf16.mxu0 0
        %2576 = vmatpush1.bf16.msra.mxu0 0
        %2577 = vmatprep.subr.bf16.mxu0 0
        %2578 = vmatpush1.bf16.msra.mxu0 0
        %2579 = vmatprep.subr.bf16.mxu0 0
        %2580 = vmatpush1.bf16.msra.mxu0 0
        %2581 = vmatprep.subr.bf16.mxu0 0
        %2582 = vmatpush1.bf16.msra.mxu0 0
        %2583 = vmatprep.subr.bf16.mxu0 0
        %2584 = vmatpush1.bf16.msra.mxu0 0
        %2585 = vmatprep.mubr.bf16.mxu0 %v2548
        %2586 = vmatmul.mubr.bf16.gmra.mrb[0].mxu0 %v2465
        %v2587 = vpop.f32.mrb[0].mxu0
        %v2588 = vadd.f32 0.0, %v2587
        %v2589 = vpop.f32.mrb[0].mxu0
        %v2590 = vpop.f32.mrb[0].mxu0
        %v2591 = vpop.f32.mrb[0].mxu0
        %2592 = vdwg.mxu0
        %v2593 = vadd.f32 %v2452, %v2588
        %v2594 = vld [vmem:[%s2026] sm:$0x3]
        %v2596 = vlaneseq
        %v2597 = vshrl.u32 %v2596, 7
        %v2598 = vsub.s32 0, %v2597
        %v2599 = vrot.slane %v2594, %v2598
        %v2600 = vlaneseq
        %v2601 = vshrl.u32 %v2600, 7
        %v2602 = vsub.s32 1, %v2601
        %v2603 = vrot.slane %v2594, %v2602
        %v2606 = vpack.c.bf16 %v2599, %v2599
        %v2607 = vpack.c.bf16 %v2603, %v2603
        %s2608 = scalar_lea.vmem %s9, 320
        %v2609 = vld [vmem:[%s2608] sm:$0xf]
        %v2610 = vld [vmem:[%s2608 + $0x4] sm:$0xf]
        %v2611 = vld [vmem:[%s2608 + $0x8] sm:$0xf]
        %v2612 = vld [vmem:[%s2608 + $0xc] sm:$0xf]
        %v2613 = vld [vmem:[%s2608 + $0x10] sm:$0xf]
        %v2614 = vld [vmem:[%s2608 + $0x14] sm:$0xf]
        %v2615 = vld [vmem:[%s2608 + $0x18] sm:$0xf]
        %v2616 = vld [vmem:[%s2608 + $0x1c] sm:$0xf]
        %v2617 = vld [vmem:[%s2608 + $0x20] sm:$0xf]
        %v2618 = vld [vmem:[%s2608 + $0x24] sm:$0xf]
        %v2619 = vld [vmem:[%s2608 + $0x28] sm:$0xf]
        %v2620 = vld [vmem:[%s2608 + $0x2c] sm:$0xf]
        %v2621 = vld [vmem:[%s2608 + $0x30] sm:$0xf]
        %v2622 = vld [vmem:[%s2608 + $0x34] sm:$0xf]
        %v2623 = vld [vmem:[%s2608 + $0x38] sm:$0xf]
        %v2624 = vld [vmem:[%s2608 + $0x3c] sm:$0xf]
        %v2625 = vld [vmem:[%s2608 + $0x40] sm:$0xf]
        %v2626 = vld [vmem:[%s2608 + $0x44] sm:$0xf]
        %v2627 = vld [vmem:[%s2608 + $0x48] sm:$0xf]
        %v2628 = vld [vmem:[%s2608 + $0x4c] sm:$0xf]
        %v2649 = vunpack.c.l.b16 %v2609
        %v2650 = vunpack.c.l.b16 %v2610
        %v2651 = vunpack.c.l.b16 %v2611
        %v2652 = vunpack.c.l.b16 %v2612
        %v2653 = vunpack.c.l.b16 %v2613
        %v2654 = vunpack.c.l.b16 %v2614
        %v2655 = vunpack.c.l.b16 %v2615
        %v2656 = vunpack.c.l.b16 %v2616
        %v2657 = vunpack.c.l.b16 %v2617
        %v2658 = vunpack.c.l.b16 %v2618
        %v2659 = vunpack.c.l.b16 %v2619
        %v2660 = vunpack.c.l.b16 %v2620
        %v2661 = vunpack.c.l.b16 %v2621
        %v2662 = vunpack.c.l.b16 %v2622
        %v2663 = vunpack.c.l.b16 %v2623
        %v2664 = vunpack.c.l.b16 %v2624
        %v2665 = vunpack.c.l.b16 %v2625
        %v2666 = vunpack.c.l.b16 %v2626
        %v2667 = vunpack.c.l.b16 %v2627
        %v2668 = vunpack.c.l.b16 %v2628
        %v2669 = vpack.c.b16 %v2650, %v2649
        %v2670 = vpack.c.b16 %v2652, %v2651
        %v2671 = vpack.c.b16 %v2654, %v2653
        %v2672 = vpack.c.b16 %v2656, %v2655
        %v2673 = vpack.c.b16 %v2658, %v2657
        %v2674 = vpack.c.b16 %v2660, %v2659
        %v2675 = vpack.c.b16 %v2662, %v2661
        %v2676 = vpack.c.b16 %v2664, %v2663
        %v2677 = vpack.c.b16 %v2666, %v2665
        %v2678 = vpack.c.b16 %v2668, %v2667
        %v2689 = vsel %vm2156, %v2607, 0
        %v2692 = vand.u32 %v2678, %v2163
        %2694 = vmatprep.subr.bf16.mxu0 0
        %2695 = vmatpush1.bf16.msra.mxu0 %v2669
        %2696 = vmatprep.subr.bf16.mxu0 0
        %2697 = vmatpush1.bf16.msra.mxu0 %v2670
        %2698 = vmatprep.subr.bf16.mxu0 0
        %2699 = vmatpush1.bf16.msra.mxu0 %v2671
        %2700 = vmatprep.subr.bf16.mxu0 0
        %2701 = vmatpush1.bf16.msra.mxu0 %v2672
        %2702 = vmatprep.subr.bf16.mxu0 0
        %2703 = vmatpush1.bf16.msra.mxu0 %v2673
        %2704 = vmatprep.subr.bf16.mxu0 0
        %2705 = vmatpush1.bf16.msra.mxu0 %v2674
        %2706 = vmatprep.subr.bf16.mxu0 0
        %2707 = vmatpush1.bf16.msra.mxu0 %v2675
        %2708 = vmatprep.subr.bf16.mxu0 0
        %2709 = vmatpush1.bf16.msra.mxu0 %v2676
        %2710 = vmatprep.subr.bf16.mxu0 0
        %2711 = vmatpush1.bf16.msra.mxu0 %v2677
        %2712 = vmatprep.subr.bf16.mxu0 0
        %2713 = vmatpush1.bf16.msra.mxu0 %v2692
        %2714 = vmatprep.subr.bf16.mxu0 0
        %2715 = vmatpush1.bf16.msra.mxu0 0
        %2716 = vmatprep.subr.bf16.mxu0 0
        %2717 = vmatpush1.bf16.msra.mxu0 0
        %2718 = vmatprep.subr.bf16.mxu0 0
        %2719 = vmatpush1.bf16.msra.mxu0 0
        %2720 = vmatprep.subr.bf16.mxu0 0
        %2721 = vmatpush1.bf16.msra.mxu0 0
        %2722 = vmatprep.subr.bf16.mxu0 0
        %2723 = vmatpush1.bf16.msra.mxu0 0
        %2724 = vmatprep.subr.bf16.mxu0 0
        %2725 = vmatpush1.bf16.msra.mxu0 0
        %2726 = vmatprep.mubr.bf16.mxu0 %v2689
        %2727 = vmatmul.mubr.bf16.gmra.mrb[0].mxu0 %v2606
        %v2728 = vpop.f32.mrb[0].mxu0
        %v2729 = vadd.f32 0.0, %v2728
        %v2730 = vpop.f32.mrb[0].mxu0
        %v2731 = vpop.f32.mrb[0].mxu0
        %v2732 = vpop.f32.mrb[0].mxu0
        %2733 = vdwg.mxu0
        %v2734 = vadd.f32 %v2593, %v2729
        %v2735 = vld [vmem:[%s10] sm:$0x1]
        %v2736 = vadd.f32 %v2734, %v2735
        %v2737 = vmax.f32 %v2736, 0.0
        %v2738 = vpack.c.bf16 %v2737, %v2737
        %v2739 = vld [vmem:[%s11] sm:$0xf]
        %v2740 = vld [vmem:[%s11 + $0x4] sm:$0xf]
        %v2741 = vld [vmem:[%s11 + $0x8] sm:$0xf]
        %v2742 = vld [vmem:[%s11 + $0xc] sm:$0xf]
        %v2743 = vld [vmem:[%s11 + $0x10] sm:$0xf]
        %v2744 = vld [vmem:[%s11 + $0x14] sm:$0xf]
        %v2745 = vld [vmem:[%s11 + $0x18] sm:$0xf]
        %v2746 = vld [vmem:[%s11 + $0x1c] sm:$0xf]
        %v2747 = vld [vmem:[%s11 + $0x20] sm:$0xf]
        %v2748 = vld [vmem:[%s11 + $0x24] sm:$0xf]
        %v2749 = vld [vmem:[%s11 + $0x28] sm:$0xf]
        %v2750 = vld [vmem:[%s11 + $0x2c] sm:$0xf]
        %v2751 = vld [vmem:[%s11 + $0x30] sm:$0xf]
        %v2752 = vld [vmem:[%s11 + $0x34] sm:$0xf]
        %v2753 = vld [vmem:[%s11 + $0x38] sm:$0xf]
        %v2754 = vld [vmem:[%s12] sm:$0x1]
        %v2770 = vunpack.c.l.b16 %v2739
        %v2771 = vunpack.c.l.b16 %v2740
        %v2772 = vunpack.c.l.b16 %v2741
        %v2773 = vunpack.c.l.b16 %v2742
        %v2774 = vunpack.c.l.b16 %v2743
        %v2775 = vunpack.c.l.b16 %v2744
        %v2776 = vunpack.c.l.b16 %v2745
        %v2777 = vunpack.c.l.b16 %v2746
        %v2778 = vunpack.c.l.b16 %v2747
        %v2779 = vunpack.c.l.b16 %v2748
        %v2780 = vunpack.c.l.b16 %v2749
        %v2781 = vunpack.c.l.b16 %v2750
        %v2782 = vunpack.c.l.b16 %v2751
        %v2783 = vunpack.c.l.b16 %v2752
        %v2784 = vunpack.c.l.b16 %v2753
        %v2785 = vpack.c.b16 %v2771, %v2770
        %v2786 = vpack.c.b16 %v2773, %v2772
        %v2787 = vpack.c.b16 %v2775, %v2774
        %v2788 = vpack.c.b16 %v2777, %v2776
        %v2789 = vpack.c.b16 %v2779, %v2778
        %v2790 = vpack.c.b16 %v2781, %v2780
        %v2791 = vpack.c.b16 %v2783, %v2782
        %v2792 = vpack.c.b16 %v2784, %v2784
        %vm2800 = vcmask 982016
        %v2802 = vsel %vm2800, %v2738, 0
        %v2805 = vsel %vm1052, %v2792, 0
        %2807 = vmatprep.subr.bf16.mxu0 0
        %2808 = vmatpush1.bf16.msra.mxu0 %v2785
        %2809 = vmatprep.subr.bf16.mxu0 0
        %2810 = vmatpush1.bf16.msra.mxu0 %v2786
        %2811 = vmatprep.subr.bf16.mxu0 0
        %2812 = vmatpush1.bf16.msra.mxu0 %v2787
        %2813 = vmatprep.subr.bf16.mxu0 0
        %2814 = vmatpush1.bf16.msra.mxu0 %v2788
        %2815 = vmatprep.subr.bf16.mxu0 0
        %2816 = vmatpush1.bf16.msra.mxu0 %v2789
        %2817 = vmatprep.subr.bf16.mxu0 0
        %2818 = vmatpush1.bf16.msra.mxu0 %v2790
        %2819 = vmatprep.subr.bf16.mxu0 0
        %2820 = vmatpush1.bf16.msra.mxu0 %v2791
        %2821 = vmatprep.subr.bf16.mxu0 0
        %2822 = vmatpush1.bf16.msra.mxu0 %v2805
        %2823 = vmatprep.subr.bf16.mxu0 0
        %2824 = vmatpush1.bf16.msra.mxu0 0
        %2825 = vmatprep.subr.bf16.mxu0 0
        %2826 = vmatpush1.bf16.msra.mxu0 0
        %2827 = vmatprep.subr.bf16.mxu0 0
        %2828 = vmatpush1.bf16.msra.mxu0 0
        %2829 = vmatprep.subr.bf16.mxu0 0
        %2830 = vmatpush1.bf16.msra.mxu0 0
        %2831 = vmatprep.subr.bf16.mxu0 0
        %2832 = vmatpush1.bf16.msra.mxu0 0
        %2833 = vmatprep.subr.bf16.mxu0 0
        %2834 = vmatpush1.bf16.msra.mxu0 0
        %2835 = vmatprep.subr.bf16.mxu0 0
        %2836 = vmatpush1.bf16.msra.mxu0 0
        %2837 = vmatprep.subr.bf16.mxu0 0
        %2838 = vmatpush1.bf16.msra.mxu0 0
        %2839 = vmatprep.mubr.bf16.mxu0 0
        %2840 = vmatmul.mubr.bf16.gmra.mrb[0].mxu0 %v2802
        %v2841 = vpop.f32.mrb[0].mxu0
        %v2842 = vadd.f32 %v2754, %v2841
        %v2843 = vpop.f32.mrb[0].mxu0
        %v2844 = vpop.f32.mrb[0].mxu0
        %v2845 = vpop.f32.mrb[0].mxu0
        %2846 = vdwg.mxu0
        %v2847 = vmax.f32 %v2842, 0.0
        %v2848 = vpack.c.bf16 %v2847, %v2847
        %v2849 = vld [vmem:[%s13] sm:$0xf]
        %v2850 = vld [vmem:[%s13 + $0x4] sm:$0xf]
        %v2851 = vld [vmem:[%s13 + $0x8] sm:$0xf]
        %v2852 = vld [vmem:[%s13 + $0xc] sm:$0xf]
        %v2853 = vld [vmem:[%s13 + $0x10] sm:$0xf]
        %v2854 = vld [vmem:[%s13 + $0x14] sm:$0xf]
        %v2855 = vld [vmem:[%s13 + $0x18] sm:$0xf]
        %v2856 = vld [vmem:[%s13 + $0x1c] sm:$0xf]
        %v2857 = vld [vmem:[%s13 + $0x20] sm:$0xf]
        %v2858 = vld [vmem:[%s13 + $0x24] sm:$0xf]
        %v2859 = vld [vmem:[%s13 + $0x28] sm:$0x3]
        %v2860 = vld [vmem:[%s14] sm:$0x1]
        %v2872 = vunpack.c.l.b16 %v2849
        %v2873 = vunpack.c.l.b16 %v2850
        %v2874 = vunpack.c.l.b16 %v2851
        %v2875 = vunpack.c.l.b16 %v2852
        %v2876 = vunpack.c.l.b16 %v2853
        %v2877 = vunpack.c.l.b16 %v2854
        %v2878 = vunpack.c.l.b16 %v2855
        %v2879 = vunpack.c.l.b16 %v2856
        %v2880 = vunpack.c.l.b16 %v2857
        %v2881 = vunpack.c.l.b16 %v2858
        %v2882 = vunpack.c.l.b16 %v2859
        %v2883 = vpack.c.b16 %v2873, %v2872
        %v2884 = vpack.c.b16 %v2875, %v2874
        %v2885 = vpack.c.b16 %v2877, %v2876
        %v2886 = vpack.c.b16 %v2879, %v2878
        %v2887 = vpack.c.b16 %v2881, %v2880
        %v2888 = vpack.c.b16 %v2882, %v2882
        %vm2894 = vcmask 687104
        %v2896 = vsel %vm2894, %v2848, 0
        %vm2898 = vcmask 1041408
        %v2900 = vsel %vm2898, %v2888, 0
        %2902 = vmatprep.subr.bf16.mxu0 0
        %2903 = vmatpush1.bf16.msra.mxu0 %v2883
        %2904 = vmatprep.subr.bf16.mxu0 0
        %2905 = vmatpush1.bf16.msra.mxu0 %v2884
        %2906 = vmatprep.subr.bf16.mxu0 0
        %2907 = vmatpush1.bf16.msra.mxu0 %v2885
        %2908 = vmatprep.subr.bf16.mxu0 0
        %2909 = vmatpush1.bf16.msra.mxu0 %v2886
        %2910 = vmatprep.subr.bf16.mxu0 0
        %2911 = vmatpush1.bf16.msra.mxu0 %v2887
        %2912 = vmatprep.subr.bf16.mxu0 0
        %2913 = vmatpush1.bf16.msra.mxu0 %v2900
        %2914 = vmatprep.subr.bf16.mxu0 0
        %2915 = vmatpush1.bf16.msra.mxu0 0
        %2916 = vmatprep.subr.bf16.mxu0 0
        %2917 = vmatpush1.bf16.msra.mxu0 0
        %2918 = vmatprep.subr.bf16.mxu0 0
        %2919 = vmatpush1.bf16.msra.mxu0 0
        %2920 = vmatprep.subr.bf16.mxu0 0
        %2921 = vmatpush1.bf16.msra.mxu0 0
        %2922 = vmatprep.subr.bf16.mxu0 0
        %2923 = vmatpush1.bf16.msra.mxu0 0
        %2924 = vmatprep.subr.bf16.mxu0 0
        %2925 = vmatpush1.bf16.msra.mxu0 0
        %2926 = vmatprep.subr.bf16.mxu0 0
        %2927 = vmatpush1.bf16.msra.mxu0 0
        %2928 = vmatprep.subr.bf16.mxu0 0
        %2929 = vmatpush1.bf16.msra.mxu0 0
        %2930 = vmatprep.subr.bf16.mxu0 0
        %2931 = vmatpush1.bf16.msra.mxu0 0
        %2932 = vmatprep.subr.bf16.mxu0 0
        %2933 = vmatpush1.bf16.msra.mxu0 0
        %2934 = vmatprep.mubr.bf16.mxu0 0
        %2935 = vmatmul.mubr.bf16.gmra.mrb[0].mxu0 %v2896
        %v2936 = vpop.f32.mrb[0].mxu0
        %v2937 = vadd.f32 %v2860, %v2936
        %v2938 = vpop.f32.mrb[0].mxu0
        %v2939 = vpop.f32.mrb[0].mxu0
        %v2940 = vpop.f32.mrb[0].mxu0
        %2941 = vdwg.mxu0
        %2942 = vst [vmem:[%s486] sm:$0x1] %v2937
        %s2943 = sand.u32 %s357, 1
        %s2944 = scalar_lea.sflag [#allocation4], %s2943
        %s2945 = sand.u32 %s357, 1
        %s2946 = scalar_lea.vmem [#allocation3], %s2945
        // Predicated region
        $region81: #{lenet5_forward.1} parent=79 // pred_check
          %p2947 = pneg %p367
        $region82: #{lenet5_forward.1} parent=79 // pred_check_branch
          %2949 = sbr.rel (%p2947) target = $region84
        $region83: #{lenet5_forward.1} parent=79 // pred_region
          %s2951 = ssub.s32 16, 16
          %2952 = vsyncadd %s2944, %s2951
          %s2953 = smul.addr %s29, 16
          %s2954 = scalar_lea.hbm %s15, %s2953
          %s2956 = sshll.u32 %s2946, 4
          %s2957 = int_to_ptr.vmem [resolvable:$true] %s2956
          %2959 = dma.vmem_to_hbm [thread:$0]  %s2957, 16, %s2954, %s2944
        $region84: #{lenet5_forward.1} parent=79 // pred_fallthru
          _
      $region80: #{lenet5_forward.1} parent=5 // pred_fallthru
        _
      %p2960 = scmp.le.s32.totalorder 2, %s24
      // Predicated region
      $region85: #{lenet5_forward.1} parent=5 // pred_check
        %p2961 = pneg %p2960
      $region86: #{lenet5_forward.1} parent=5 // pred_check_branch
        %2963 = sbr.rel (%p2961) target = $region88
      $region87: #{lenet5_forward.1} parent=5 // pred_region
        %s2964 = ssub.s32 %s24, 2
        // Predicated region
        $region89: #{lenet5_forward.1} parent=87 // pred_check
          %p2965 = pneg %p373
        $region90: #{lenet5_forward.1} parent=87 // pred_check_branch
          %2967 = sbr.rel (%p2965) target = $region92
        $region91: #{lenet5_forward.1} parent=87 // pred_region
          %s2968 = sand.u32 %s358, 1
          %s2969 = scalar_lea.sflag [#allocation4], %s2968
          %s2970 = sand.u32 %s358, 1
          %s2971 = scalar_lea.vmem [#allocation3], %s2970
          %2972 = dma.done %s2969, 16
        $region92: #{lenet5_forward.1} parent=87 // pred_fallthru
          _
      $region88: #{lenet5_forward.1} parent=5 // pred_fallthru
        _
    $region6: #{lenet5_forward.1} parent=1 // loop_footer
      %s28 = sadd.s32 1, %s24
    $region7: #{lenet5_forward.1} parent=1 // loop_footer_branch
      %23 = sbr.rel target = $region3
    $region8: #{lenet5_forward.1} parent=1 // loop_exit
      _
    %2973 = vsyncpa [#allocation4], 1
    %s2974 = scalar_lea.sflag [#allocation4], 1
    %2975 = vsyncpa %s2974, 1

</llo_original>
